<compile_context>
chip_gen: v6e
topology: v6e:2x2x1
jax: 0.10.0
libtpu: 0.0.40
codegen_flags: <defaults>
</compile_context>

<pallas_src>
import functools
import math

import jax
import jax.numpy as jnp
from jax.experimental import pallas as pl
from jax.experimental.pallas import tpu as pltpu

VMEM_LIMIT_BYTES = 48 * 1024 * 1024    # explicit scoped-VMEM budget (<= v7x 64 MiB)
NEG_INF = -1e6                          # d2l masked-softmax sentinel
NSP_PAD = 128                           # pad the 2-class NSP output to a full lane tile


# ----------------------------------------------------------------------------
# shared in-kernel helpers
# ----------------------------------------------------------------------------
def _layernorm(x, gamma, beta, eps=1e-5):
    mu = jnp.mean(x, axis=-1, keepdims=True)
    xc = x - mu
    var = jnp.mean(xc * xc, axis=-1, keepdims=True)
    return xc * jax.lax.rsqrt(var + eps) * gamma + beta


# ----------------------------------------------------------------------------
# transformer encoder block kernel (one batch tile per grid step)
# ----------------------------------------------------------------------------
def encoder_block_kernel(x_ref, bias_ref,
                         wqkv_ref, bqkv_ref, wo_ref, bo_ref,
                         g1_ref, be1_ref,
                         w1_ref, bb1_ref, w2_ref, bb2_ref,
                         g2_ref, be2_ref,
                         out_ref, *, num_heads, batch_tile, seq_len, hidden):
    bt, S, H, nh = batch_tile, seq_len, hidden, num_heads
    dh = H // nh
    scale = 1.0 / math.sqrt(dh)

    x32 = x_ref[...].reshape(bt * S, H)                 # f32 (bt*S, H)
    x_bf = x32.astype(jnp.bfloat16)

    # --- fused QKV projection: one bf16 MXU op instead of three ---
    qkv = jnp.dot(x_bf, wqkv_ref[...], preferred_element_type=jnp.float32)
    qkv = qkv + bqkv_ref[...]                           # f32 (bt*S, 3H)
    qkv_bf = qkv.astype(jnp.bfloat16)
    q = qkv_bf[:, 0 * H:1 * H]
    k = qkv_bf[:, 1 * H:2 * H]
    v = qkv_bf[:, 2 * H:3 * H]

    # --- multi-head attention: heads (and sequences of this tile) stacked on
    #     the leading batch axis of one 3-D einsum; additive mask hoisted ---
    bias3 = bias_ref[...]                               # (bt, 1, S) additive, f32
    q_l, k_l, v_l, m_l = [], [], [], []
    for b in range(bt):                                 # static tiny unroll
        rows = slice(b * S, (b + 1) * S)
        brow = bias3[b:b + 1]                           # (1, 1, S)
        for h in range(nh):
            cols = slice(h * dh, (h + 1) * dh)
            q_l.append(q[rows, cols])
            k_l.append(k[rows, cols])
            v_l.append(v[rows, cols])
            m_l.append(brow)
    qh = jnp.stack(q_l, axis=0)                         # (bt*nh, S, dh) bf16
    kh = jnp.stack(k_l, axis=0)
    vh = jnp.stack(v_l, axis=0)
    mh = jnp.concatenate(m_l, axis=0)                   # (bt*nh, 1, S) f32

    scores = jnp.einsum('bqd,bkd->bqk', qh, kh,
                        preferred_element_type=jnp.float32) * scale + mh
    scores = scores - jnp.max(scores, axis=-1, keepdims=True)
    p = jnp.exp(scores)
    p = p * pl.reciprocal(jnp.sum(p, axis=-1, keepdims=True), approx=True)
    ctx = jnp.einsum('bqk,bkd->bqd', p.astype(jnp.bfloat16), vh,
                     preferred_element_type=jnp.float32)        # (bt*nh, S, dh)

    # --- output projection: accumulate ctx_h @ Wo[h] — no lane-axis concat ---
    wo = wo_ref[...]                                    # (H, H) bf16
    attn_rows = []
    for b in range(bt):
        acc = jnp.zeros((S, H), jnp.float32)
        for h in range(nh):
            acc = acc + jnp.dot(ctx[b * nh + h].astype(jnp.bfloat16),
                                wo[h * dh:(h + 1) * dh, :],
                                preferred_element_type=jnp.float32)
        attn_rows.append(acc)
    attn = jnp.concatenate(attn_rows, axis=0) + bo_ref[...]     # (bt*S, H) f32

    y = _layernorm(x32 + attn, g1_ref[...], be1_ref[...])       # AddNorm 1 (f32)

    # --- position-wise FFN (bf16 MXU inputs, f32 accumulation) ---
    hdn = jnp.dot(y.astype(jnp.bfloat16), w1_ref[...],
                  preferred_element_type=jnp.float32) + bb1_ref[...]
    hdn = jnp.maximum(hdn, 0.0)
    ffn = jnp.dot(hdn.astype(jnp.bfloat16), w2_ref[...],
                  preferred_element_type=jnp.float32) + bb2_ref[...]
    out = _layernorm(y + ffn, g2_ref[...], be2_ref[...])        # AddNorm 2 (f32)

    out_ref[...] = out.reshape(bt, S, H).astype(out_ref.dtype)


def encoder_block_apply(x, attn_bias, p, num_heads, batch_tile):
    B, S, H = x.shape
    bt = batch_tile
    assert B % bt == 0
    grid = (B // bt,)

    weights = [p['wqkv'], p['bqkv'], p['wo'], p['bo'],
               p['g1'], p['be1'],
               p['w1'], p['bb1'], p['w2'], p['bb2'],
               p['g2'], p['be2']]

    def full_spec(arr):
        nd = arr.ndim
        return pl.BlockSpec(arr.shape, lambda b, nd=nd: (0,) * nd)

    in_specs = ([pl.BlockSpec((bt, S, H), lambda b: (b, 0, 0)),
                 pl.BlockSpec((bt, 1, S), lambda b: (b, 0, 0))]
                + [full_spec(w) for w in weights])
    out_specs = pl.BlockSpec((bt, S, H), lambda b: (b, 0, 0))

    kernel = functools.partial(encoder_block_kernel, num_heads=num_heads,
                               batch_tile=bt, seq_len=S, hidden=H)
    return pl.pallas_call(
        kernel,
        out_shape=jax.ShapeDtypeStruct((B, S, H), jnp.float32),
        grid=grid,
        in_specs=in_specs,
        out_specs=out_specs,
        compiler_params=pltpu.CompilerParams(
            dimension_semantics=("parallel",),          # both TCs on v7x
            vmem_limit_bytes=VMEM_LIMIT_BYTES),
    )(x, attn_bias, *weights)


# ----------------------------------------------------------------------------
# MLM head kernel: Linear -> ReLU -> LayerNorm -> Linear(vocab tile)
# (vocab dimension tiled on a parallel grid axis; the small hidden transform is
#  recomputed per tile so the vocab axis can stay "parallel" across cores)
# ----------------------------------------------------------------------------
def mlm_kernel(x_ref, w1_ref, b1_ref, g_ref, be_ref, w2_ref, b2_ref, out_ref):
    x = x_ref[...].astype(jnp.bfloat16)
    h = jnp.dot(x, w1_ref[...], preferred_element_type=jnp.float32) + b1_ref[...]
    h = jnp.maximum(h, 0.0)
    h = _layernorm(h, g_ref[...], be_ref[...])
    out_ref[...] = jnp.dot(h.astype(jnp.bfloat16), w2_ref[...],
                           preferred_element_type=jnp.float32) + b2_ref[...]


def mlm_apply(mask_embd_flat, p, vocab_size, vocab_tile=2048):
    n, H = mask_embd_flat.shape
    w2, b2 = p['w2'], p['b2']
    V = w2.shape[1]
    Vp = pl.cdiv(V, 128) * 128
    tv = min(vocab_tile, Vp)
    Vp = pl.cdiv(Vp, tv) * tv
    if Vp != V:
        w2 = jnp.pad(w2, ((0, 0), (0, Vp - V)))
        b2 = jnp.pad(b2, ((0, 0), (0, Vp - V)))
    grid = (Vp // tv,)

    out = pl.pallas_call(
        mlm_kernel,
        out_shape=jax.ShapeDtypeStruct((n, Vp), jnp.float32),
        grid=grid,
        in_specs=[
            pl.BlockSpec((n, H), lambda j: (0, 0)),
            pl.BlockSpec(p['w1'].shape, lambda j: (0, 0)),
            pl.BlockSpec(p['b1'].shape, lambda j: (0, 0)),
            pl.BlockSpec(p['g'].shape, lambda j: (0, 0)),
            pl.BlockSpec(p['be'].shape, lambda j: (0, 0)),
            pl.BlockSpec((H, tv), lambda j: (0, j)),    # vocab tile pipelined
            pl.BlockSpec((1, tv), lambda j: (0, j)),
        ],
        out_specs=pl.BlockSpec((n, tv), lambda j: (0, j)),
        compiler_params=pltpu.CompilerParams(
            dimension_semantics=("parallel",),
            vmem_limit_bytes=VMEM_LIMIT_BYTES),
    )(mask_embd_flat, p['w1'], p['b1'], p['g'], p['be'], w2, b2)
    return out[:, :vocab_size]


# ----------------------------------------------------------------------------
# pooled hidden (Linear+Tanh) fused with NSP head; lane-padded output
# ----------------------------------------------------------------------------
def nsp_kernel(x_ref, wh_ref, bh_ref, wn_ref, bn_ref, out_ref):
    x = x_ref[...].astype(jnp.bfloat16)
    h = jnp.tanh(jnp.dot(x, wh_ref[...], preferred_element_type=jnp.float32)
                 + bh_ref[...])
    out_ref[...] = jnp.dot(h.astype(jnp.bfloat16), wn_ref[...],
                           preferred_element_type=jnp.float32) + bn_ref[...]


def nsp_apply(cls_x, p):
    B, _ = cls_x.shape
    out = pl.pallas_call(
        nsp_kernel,
        out_shape=jax.ShapeDtypeStruct((B, NSP_PAD), jnp.float32),
        compiler_params=pltpu.CompilerParams(vmem_limit_bytes=VMEM_LIMIT_BYTES),
    )(cls_x, p['wh'], p['bh'], p['wn'], p['bn'])
    return out[:, :2]


# ----------------------------------------------------------------------------
# parameter init (deterministic, PyTorch-like; matmul weights stored bf16)
# ----------------------------------------------------------------------------
def _dense(key, fan_in, fan_out):
    kw, kb = jax.random.split(key)
    bound = 1.0 / math.sqrt(fan_in)
    w = jax.random.uniform(kw, (fan_in, fan_out), jnp.float32, -bound, bound)
    b = jax.random.uniform(kb, (1, fan_out), jnp.float32, -bound, bound)
    return w.astype(jnp.bfloat16), b                    # bf16 weight, f32 bias


def init_params(key, vocab_size, num_blks, num_hiddens, ffn_num_hiddens, seq_len):
    H, F = num_hiddens, ffn_num_hiddens
    keys = iter(jax.random.split(key, 16 + 8 * num_blks))
    params = {
        'tok_emb': jax.random.normal(next(keys), (vocab_size, H), jnp.float32),
        'seg_emb': jax.random.normal(next(keys), (2, H), jnp.float32),
        'pos_emb': jax.random.normal(next(keys), (1, seq_len, H), jnp.float32),
        'blocks': [],
    }
    for _ in range(num_blks):
        wq, bq = _dense(next(keys), H, H)
        wk, bk = _dense(next(keys), H, H)
        wv, bv = _dense(next(keys), H, H)
        wo, bo = _dense(next(keys), H, H)
        w1, bb1 = _dense(next(keys), H, F)
        w2, bb2 = _dense(next(keys), F, H)
        params['blocks'].append({
            # fused QKV projection (one MXU op per block)
            'wqkv': jnp.concatenate([wq, wk, wv], axis=1),       # (H, 3H) bf16
            'bqkv': jnp.concatenate([bq, bk, bv], axis=1),       # (1, 3H) f32
            'wo': wo, 'bo': bo,
            'g1': jnp.ones((1, H), jnp.float32), 'be1': jnp.zeros((1, H), jnp.float32),
            'w1': w1, 'bb1': bb1, 'w2': w2, 'bb2': bb2,
            'g2': jnp.ones((1, H), jnp.float32), 'be2': jnp.zeros((1, H), jnp.float32),
        })
    mw1, mb1 = _dense(next(keys), H, H)
    mw2, mb2 = _dense(next(keys), H, vocab_size)
    params['mlm'] = {'w1': mw1, 'b1': mb1,
                     'g': jnp.ones((1, H), jnp.float32),
                     'be': jnp.zeros((1, H), jnp.float32),
                     'w2': mw2, 'b2': mb2}
    wh, bh = _dense(next(keys), H, H)
    wn, bn = _dense(next(keys), H, 2)
    # pad NSP head to 128 output lanes (lane-dense store; sliced back in JAX)
    params['nsp'] = {
        'wh': wh, 'bh': bh,
        'wn': jnp.pad(wn, ((0, 0), (0, NSP_PAD - 2))),
        'bn': jnp.pad(bn, ((0, 0), (0, NSP_PAD - 2))),
    }
    return params


# ----------------------------------------------------------------------------
# full BERT forward
# ----------------------------------------------------------------------------
def bert_forward(params, tokens, segments, valid_lens, pred_positions,
                 *, num_heads, batch_tile=None):
    # embedding gathers + learned absolute positional encoding (glue, plain JAX)
    x = (params['tok_emb'][tokens] + params['seg_emb'][segments]
         + params['pos_emb']).astype(jnp.float32)
    B, S, H = x.shape

    # additive key-mask from valid_lens, built once and reused by every block
    if valid_lens is None:
        attn_bias = jnp.zeros((B, 1, S), jnp.float32)
    else:
        key_pos = jnp.arange(S, dtype=jnp.int32)[None, :]
        attn_bias = jnp.where(key_pos < valid_lens.astype(jnp.int32)[:, None],
                              0.0, NEG_INF).astype(jnp.float32).reshape(B, 1, S)

    if batch_tile is None:
        # keep >=2 grid steps (v7x has 2 TensorCores) while growing the block
        batch_tile = B // 2 if (B % 2 == 0 and B >= 4) else 1

    # TODO(synk): dropout layers are identity here (inference / p ignored).
    for blk in params['blocks']:
        x = encoder_block_apply(x, attn_bias, blk, num_heads, batch_tile)

    embd_X = x

    # MLM: gather masked-token embeddings (glue), vocab-tiled MLP head in Pallas
    mlm_Y_hat = None
    if pred_positions is not None:
        nm = pred_positions.shape[1]
        batch_idx = jnp.repeat(jnp.arange(B), nm)
        mask_embd = embd_X[batch_idx, pred_positions.reshape(-1)]      # (B*nm, H)
        vocab_size = params['tok_emb'].shape[0]
        mlm_flat = mlm_apply(mask_embd, params['mlm'], vocab_size)
        mlm_Y_hat = mlm_flat.reshape(B, nm, vocab_size)

    # NSP: pooled CLS -> Linear+Tanh -> Linear(2), fused Pallas kernel
    nsp_Y_hat = nsp_apply(embd_X[:, 0, :], params['nsp'])
    return embd_X, mlm_Y_hat, nsp_Y_hat


# ----------------------------------------------------------------------------
if __name__ == "__main__":
    vocab_size = 128
    num_blks = 2
    num_heads = 2
    num_hiddens = 32
    ffn_num_hiddens = 64
    seq_len = 8
    batch = 2
    num_mask = 3

    key = jax.random.PRNGKey(0)
    kp, kt, ks, kpp = jax.random.split(key, 4)

    params = init_params(kp, vocab_size, num_blks, num_hiddens,
                         ffn_num_hiddens, seq_len)

    tokens = jax.random.randint(kt, (batch, seq_len), 0, vocab_size, jnp.int32)
    segments = jax.random.randint(ks, (batch, seq_len), 0, 2, jnp.int32)
    valid_lens = jnp.array([seq_len, 5], dtype=jnp.int32)
    pred_positions = jax.random.randint(kpp, (batch, num_mask), 0, seq_len, jnp.int32)

    embd_X, mlm_Y_hat, nsp_Y_hat = bert_forward(
        params, tokens, segments, valid_lens, pred_positions, num_heads=num_heads)

    jax.block_until_ready((embd_X, mlm_Y_hat, nsp_Y_hat))
    assert embd_X.shape == (batch, seq_len, num_hiddens)
    assert mlm_Y_hat.shape == (batch, num_mask, vocab_size)
    assert nsp_Y_hat.shape == (batch, 2)
    assert bool(jnp.all(jnp.isfinite(embd_X)))
    assert bool(jnp.all(jnp.isfinite(mlm_Y_hat)))
    assert bool(jnp.all(jnp.isfinite(nsp_Y_hat)))
    print("KERNEL_OK")
</pallas_src>

<mosaic_0001>
module attributes {stable_mosaic.version = 11 : i64} {
  func.func @encoder_block_kernel(%arg0: i32, %arg1: memref<1x8x32xf32, #tpu.memory_space<vmem>>, %arg2: memref<1x1x8xf32, #tpu.memory_space<vmem>>, %arg3: memref<32x96xbf16, #tpu.memory_space<vmem>>, %arg4: memref<1x96xf32, #tpu.memory_space<vmem>>, %arg5: memref<32x32xbf16, #tpu.memory_space<vmem>>, %arg6: memref<1x32xf32, #tpu.memory_space<vmem>>, %arg7: memref<1x32xf32, #tpu.memory_space<vmem>>, %arg8: memref<1x32xf32, #tpu.memory_space<vmem>>, %arg9: memref<32x64xbf16, #tpu.memory_space<vmem>>, %arg10: memref<1x64xf32, #tpu.memory_space<vmem>>, %arg11: memref<64x32xbf16, #tpu.memory_space<vmem>>, %arg12: memref<1x32xf32, #tpu.memory_space<vmem>>, %arg13: memref<1x32xf32, #tpu.memory_space<vmem>>, %arg14: memref<1x32xf32, #tpu.memory_space<vmem>>, %arg15: memref<1x8x32xf32, #tpu.memory_space<vmem>>) attributes {dimension_semantics = [#tpu.dimension_semantics<parallel>], iteration_bounds = array<i64: 2>, scalar_prefetch = 0 : i64, scratch_operands = 0 : i64, tpu.core_type = #tpu.core_type<tc>, window_params = [{transform_indices = @transform_0, window_bounds = array<i64: 1, 8, 32>}, {transform_indices = @transform_1, window_bounds = array<i64: 1, 1, 8>}, {pipeline_mode = #tpu.pipeline_mode<synchronous>, transform_indices = @transform_2, window_bounds = array<i64: 32, 96>}, {pipeline_mode = #tpu.pipeline_mode<synchronous>, transform_indices = @transform_3, window_bounds = array<i64: 1, 96>}, {pipeline_mode = #tpu.pipeline_mode<synchronous>, transform_indices = @transform_4, window_bounds = array<i64: 32, 32>}, {pipeline_mode = #tpu.pipeline_mode<synchronous>, transform_indices = @transform_5, window_bounds = array<i64: 1, 32>}, {pipeline_mode = #tpu.pipeline_mode<synchronous>, transform_indices = @transform_6, window_bounds = array<i64: 1, 32>}, {pipeline_mode = #tpu.pipeline_mode<synchronous>, transform_indices = @transform_7, window_bounds = array<i64: 1, 32>}, {pipeline_mode = #tpu.pipeline_mode<synchronous>, transform_indices = @transform_8, window_bounds = array<i64: 32, 64>}, {pipeline_mode = #tpu.pipeline_mode<synchronous>, transform_indices = @transform_9, window_bounds = array<i64: 1, 64>}, {pipeline_mode = #tpu.pipeline_mode<synchronous>, transform_indices = @transform_10, window_bounds = array<i64: 64, 32>}, {pipeline_mode = #tpu.pipeline_mode<synchronous>, transform_indices = @transform_11, window_bounds = array<i64: 1, 32>}, {pipeline_mode = #tpu.pipeline_mode<synchronous>, transform_indices = @transform_12, window_bounds = array<i64: 1, 32>}, {pipeline_mode = #tpu.pipeline_mode<synchronous>, transform_indices = @transform_13, window_bounds = array<i64: 1, 32>}, {transform_indices = @transform_14, window_bounds = array<i64: 1, 8, 32>}]} {
    %c0 = arith.constant 0 : index
    %c0_0 = arith.constant 0 : index
    %c0_1 = arith.constant 0 : index
    %0 = vector.load %arg1[%c0, %c0_0, %c0_1] : memref<1x8x32xf32, #tpu.memory_space<vmem>>, vector<1x8x32xf32>
    %1 = vector.shape_cast %0 : vector<1x8x32xf32> to vector<8x32xf32>
    %2 = arith.truncf %1 : vector<8x32xf32> to vector<8x32xbf16>
    %c0_2 = arith.constant 0 : index
    %c0_3 = arith.constant 0 : index
    %3 = vector.load %arg3[%c0_2, %c0_3] : memref<32x96xbf16, #tpu.memory_space<vmem>>, vector<32x96xbf16>
    %cst = arith.constant dense<0.000000e+00> : vector<8x96xf32>
    %4 = tpu.matmul %2, %3, %cst {dimension_numbers = #tpu.dot_dimension_numbers<[1], [0], [0], [1], [0, 0, 1, 1], [], []>} : vector<8x32xbf16>, vector<32x96xbf16>, vector<8x96xf32> -> vector<8x96xf32>
    %c0_4 = arith.constant 0 : index
    %c0_5 = arith.constant 0 : index
    %5 = vector.load %arg4[%c0_4, %c0_5] : memref<1x96xf32, #tpu.memory_space<vmem>>, vector<1x96xf32>
    %6 = vector.broadcast %5 : vector<1x96xf32> to vector<8x96xf32>
    %7 = arith.addf %4, %6 : vector<8x96xf32>
    %8 = arith.truncf %7 : vector<8x96xf32> to vector<8x96xbf16>
    %9 = vector.extract_strided_slice %8 {offsets = [0, 0], sizes = [8, 32], strides = [1, 1]} : vector<8x96xbf16> to vector<8x32xbf16>
    %10 = vector.extract_strided_slice %8 {offsets = [0, 32], sizes = [8, 32], strides = [1, 1]} : vector<8x96xbf16> to vector<8x32xbf16>
    %11 = vector.extract_strided_slice %8 {offsets = [0, 64], sizes = [8, 32], strides = [1, 1]} : vector<8x96xbf16> to vector<8x32xbf16>
    %c0_6 = arith.constant 0 : index
    %c0_7 = arith.constant 0 : index
    %c0_8 = arith.constant 0 : index
    %12 = vector.load %arg2[%c0_6, %c0_7, %c0_8] : memref<1x1x8xf32, #tpu.memory_space<vmem>>, vector<1x1x8xf32>
    %13 = vector.extract_strided_slice %9 {offsets = [0, 0], sizes = [8, 16], strides = [1, 1]} : vector<8x32xbf16> to vector<8x16xbf16>
    %14 = vector.extract_strided_slice %10 {offsets = [0, 0], sizes = [8, 16], strides = [1, 1]} : vector<8x32xbf16> to vector<8x16xbf16>
    %15 = vector.extract_strided_slice %11 {offsets = [0, 0], sizes = [8, 16], strides = [1, 1]} : vector<8x32xbf16> to vector<8x16xbf16>
    %16 = vector.extract_strided_slice %9 {offsets = [0, 16], sizes = [8, 16], strides = [1, 1]} : vector<8x32xbf16> to vector<8x16xbf16>
    %17 = vector.extract_strided_slice %10 {offsets = [0, 16], sizes = [8, 16], strides = [1, 1]} : vector<8x32xbf16> to vector<8x16xbf16>
    %18 = vector.extract_strided_slice %11 {offsets = [0, 16], sizes = [8, 16], strides = [1, 1]} : vector<8x32xbf16> to vector<8x16xbf16>
    %19 = vector.shape_cast %13 : vector<8x16xbf16> to vector<1x8x16xbf16>
    %20 = vector.shape_cast %16 : vector<8x16xbf16> to vector<1x8x16xbf16>
    %21 = tpu.concatenate %19, %20 in 0 : vector<1x8x16xbf16>, vector<1x8x16xbf16> -> vector<2x8x16xbf16>
    %22 = vector.shape_cast %14 : vector<8x16xbf16> to vector<1x8x16xbf16>
    %23 = vector.shape_cast %17 : vector<8x16xbf16> to vector<1x8x16xbf16>
    %24 = tpu.concatenate %22, %23 in 0 : vector<1x8x16xbf16>, vector<1x8x16xbf16> -> vector<2x8x16xbf16>
    %25 = vector.shape_cast %15 : vector<8x16xbf16> to vector<1x8x16xbf16>
    %26 = vector.shape_cast %18 : vector<8x16xbf16> to vector<1x8x16xbf16>
    %27 = tpu.concatenate %25, %26 in 0 : vector<1x8x16xbf16>, vector<1x8x16xbf16> -> vector<2x8x16xbf16>
    %28 = tpu.concatenate %12, %12 in 0 : vector<1x1x8xf32>, vector<1x1x8xf32> -> vector<2x1x8xf32>
    "tpu.trace_start"() <{level = 10 : i32, message = "bqd,bkd->bqk"}> : () -> ()
    %cst_9 = arith.constant dense<0.000000e+00> : vector<2x8x8xf32>
    %29 = tpu.matmul %21, %24, %cst_9 {dimension_numbers = #tpu.dot_dimension_numbers<[2], [2], [1], [1], [0, 0, 0, 1, 1, 1], [0], [0]>} : vector<2x8x16xbf16>, vector<2x8x16xbf16>, vector<2x8x8xf32> -> vector<2x8x8xf32>
    "tpu.trace_stop"() : () -> ()
    %cst_10 = arith.constant 2.500000e-01 : f32
    %30 = vector.broadcast %cst_10 : f32 to vector<2x8x8xf32>
    %31 = arith.mulf %29, %30 : vector<2x8x8xf32>
    %32 = vector.broadcast %28 : vector<2x1x8xf32> to vector<2x8x8xf32>
    %33 = arith.addf %31, %32 : vector<2x8x8xf32>
    %cst_11 = arith.constant dense<0xFF800000> : vector<2x8xf32>
    %34 = vector.multi_reduction <maximumf>, %33, %cst_11 [2] : vector<2x8x8xf32> to vector<2x8xf32>
    %35 = vector.shape_cast %34 : vector<2x8xf32> to vector<2x8x1xf32>
    %36 = vector.broadcast %35 : vector<2x8x1xf32> to vector<2x8x8xf32>
    %37 = arith.subf %33, %36 : vector<2x8x8xf32>
    %38 = math.exp %37 : vector<2x8x8xf32>
    %cst_12 = arith.constant dense<0.000000e+00> : vector<2x8xf32>
    %39 = vector.multi_reduction <add>, %38, %cst_12 [2] : vector<2x8x8xf32> to vector<2x8xf32>
    %40 = vector.shape_cast %39 : vector<2x8xf32> to vector<2x8x1xf32>
    %41 = tpu.reciprocal %40 {approx = true} : vector<2x8x1xf32> -> vector<2x8x1xf32>
    %42 = vector.broadcast %41 : vector<2x8x1xf32> to vector<2x8x8xf32>
    %43 = arith.mulf %38, %42 : vector<2x8x8xf32>
    %44 = arith.truncf %43 : vector<2x8x8xf32> to vector<2x8x8xbf16>
    "tpu.trace_start"() <{level = 10 : i32, message = "bqk,bkd->bqd"}> : () -> ()
    %cst_13 = arith.constant dense<0.000000e+00> : vector<2x8x16xf32>
    %45 = tpu.matmul %44, %27, %cst_13 {dimension_numbers = #tpu.dot_dimension_numbers<[2], [1], [1], [2], [0, 0, 0, 1, 1, 2], [0], [0]>} : vector<2x8x8xbf16>, vector<2x8x16xbf16>, vector<2x8x16xf32> -> vector<2x8x16xf32>
    "tpu.trace_stop"() : () -> ()
    %c0_14 = arith.constant 0 : index
    %c0_15 = arith.constant 0 : index
    %46 = vector.load %arg5[%c0_14, %c0_15] : memref<32x32xbf16, #tpu.memory_space<vmem>>, vector<32x32xbf16>
    %cst_16 = arith.constant 0.000000e+00 : f32
    %47 = vector.broadcast %cst_16 : f32 to vector<8x32xf32>
    %48 = vector.extract_strided_slice %45 {offsets = [0, 0, 0], sizes = [1, 8, 16], strides = [1, 1, 1]} : vector<2x8x16xf32> to vector<1x8x16xf32>
    %49 = vector.shape_cast %48 : vector<1x8x16xf32> to vector<8x16xf32>
    %50 = arith.truncf %49 : vector<8x16xf32> to vector<8x16xbf16>
    %51 = vector.extract_strided_slice %46 {offsets = [0, 0], sizes = [16, 32], strides = [1, 1]} : vector<32x32xbf16> to vector<16x32xbf16>
    %cst_17 = arith.constant dense<0.000000e+00> : vector<8x32xf32>
    %52 = tpu.matmul %50, %51, %cst_17 {dimension_numbers = #tpu.dot_dimension_numbers<[1], [0], [0], [1], [0, 0, 1, 1], [], []>} : vector<8x16xbf16>, vector<16x32xbf16>, vector<8x32xf32> -> vector<8x32xf32>
    %53 = arith.addf %47, %52 : vector<8x32xf32>
    %54 = vector.extract_strided_slice %45 {offsets = [1, 0, 0], sizes = [1, 8, 16], strides = [1, 1, 1]} : vector<2x8x16xf32> to vector<1x8x16xf32>
    %55 = vector.shape_cast %54 : vector<1x8x16xf32> to vector<8x16xf32>
    %56 = arith.truncf %55 : vector<8x16xf32> to vector<8x16xbf16>
    %57 = vector.extract_strided_slice %46 {offsets = [16, 0], sizes = [16, 32], strides = [1, 1]} : vector<32x32xbf16> to vector<16x32xbf16>
    %cst_18 = arith.constant dense<0.000000e+00> : vector<8x32xf32>
    %58 = tpu.matmul %56, %57, %cst_18 {dimension_numbers = #tpu.dot_dimension_numbers<[1], [0], [0], [1], [0, 0, 1, 1], [], []>} : vector<8x16xbf16>, vector<16x32xbf16>, vector<8x32xf32> -> vector<8x32xf32>
    %59 = arith.addf %53, %58 : vector<8x32xf32>
    %c0_19 = arith.constant 0 : index
    %c0_20 = arith.constant 0 : index
    %60 = vector.load %arg6[%c0_19, %c0_20] : memref<1x32xf32, #tpu.memory_space<vmem>>, vector<1x32xf32>
    %61 = vector.broadcast %60 : vector<1x32xf32> to vector<8x32xf32>
    %62 = arith.addf %59, %61 : vector<8x32xf32>
    %63 = arith.addf %1, %62 : vector<8x32xf32>
    %c0_21 = arith.constant 0 : index
    %c0_22 = arith.constant 0 : index
    %64 = vector.load %arg7[%c0_21, %c0_22] : memref<1x32xf32, #tpu.memory_space<vmem>>, vector<1x32xf32>
    %c0_23 = arith.constant 0 : index
    %c0_24 = arith.constant 0 : index
    %65 = vector.load %arg8[%c0_23, %c0_24] : memref<1x32xf32, #tpu.memory_space<vmem>>, vector<1x32xf32>
    %cst_25 = arith.constant dense<0.000000e+00> : vector<8xf32>
    %66 = vector.multi_reduction <add>, %63, %cst_25 [1] : vector<8x32xf32> to vector<8xf32>
    %67 = vector.shape_cast %66 : vector<8xf32> to vector<8x1xf32>
    %cst_26 = arith.constant 3.200000e+01 : f32
    %68 = vector.broadcast %cst_26 : f32 to vector<8x1xf32>
    %69 = arith.divf %67, %68 : vector<8x1xf32>
    %70 = vector.broadcast %69 : vector<8x1xf32> to vector<8x32xf32>
    %71 = arith.subf %63, %70 : vector<8x32xf32>
    %72 = arith.mulf %71, %71 : vector<8x32xf32>
    %cst_27 = arith.constant dense<0.000000e+00> : vector<8xf32>
    %73 = vector.multi_reduction <add>, %72, %cst_27 [1] : vector<8x32xf32> to vector<8xf32>
    %74 = vector.shape_cast %73 : vector<8xf32> to vector<8x1xf32>
    %cst_28 = arith.constant 3.200000e+01 : f32
    %75 = vector.broadcast %cst_28 : f32 to vector<8x1xf32>
    %76 = arith.divf %74, %75 : vector<8x1xf32>
    %cst_29 = arith.constant 9.99999974E-6 : f32
    %77 = vector.broadcast %cst_29 : f32 to vector<8x1xf32>
    %78 = arith.addf %76, %77 : vector<8x1xf32>
    %79 = math.rsqrt %78 : vector<8x1xf32>
    %80 = vector.broadcast %79 : vector<8x1xf32> to vector<8x32xf32>
    %81 = arith.mulf %71, %80 : vector<8x32xf32>
    %82 = vector.broadcast %64 : vector<1x32xf32> to vector<8x32xf32>
    %83 = arith.mulf %81, %82 : vector<8x32xf32>
    %84 = vector.broadcast %65 : vector<1x32xf32> to vector<8x32xf32>
    %85 = arith.addf %83, %84 : vector<8x32xf32>
    %86 = arith.truncf %85 : vector<8x32xf32> to vector<8x32xbf16>
    %c0_30 = arith.constant 0 : index
    %c0_31 = arith.constant 0 : index
    %87 = vector.load %arg9[%c0_30, %c0_31] : memref<32x64xbf16, #tpu.memory_space<vmem>>, vector<32x64xbf16>
    %cst_32 = arith.constant dense<0.000000e+00> : vector<8x64xf32>
    %88 = tpu.matmul %86, %87, %cst_32 {dimension_numbers = #tpu.dot_dimension_numbers<[1], [0], [0], [1], [0, 0, 1, 1], [], []>} : vector<8x32xbf16>, vector<32x64xbf16>, vector<8x64xf32> -> vector<8x64xf32>
    %c0_33 = arith.constant 0 : index
    %c0_34 = arith.constant 0 : index
    %89 = vector.load %arg10[%c0_33, %c0_34] : memref<1x64xf32, #tpu.memory_space<vmem>>, vector<1x64xf32>
    %90 = vector.broadcast %89 : vector<1x64xf32> to vector<8x64xf32>
    %91 = arith.addf %88, %90 : vector<8x64xf32>
    %cst_35 = arith.constant 0.000000e+00 : f32
    %92 = vector.broadcast %cst_35 : f32 to vector<8x64xf32>
    %93 = arith.maximumf %91, %92 : vector<8x64xf32>
    %94 = arith.truncf %93 : vector<8x64xf32> to vector<8x64xbf16>
    %c0_36 = arith.constant 0 : index
    %c0_37 = arith.constant 0 : index
    %95 = vector.load %arg11[%c0_36, %c0_37] : memref<64x32xbf16, #tpu.memory_space<vmem>>, vector<64x32xbf16>
    %cst_38 = arith.constant dense<0.000000e+00> : vector<8x32xf32>
    %96 = tpu.matmul %94, %95, %cst_38 {dimension_numbers = #tpu.dot_dimension_numbers<[1], [0], [0], [1], [0, 0, 1, 1], [], []>} : vector<8x64xbf16>, vector<64x32xbf16>, vector<8x32xf32> -> vector<8x32xf32>
    %c0_39 = arith.constant 0 : index
    %c0_40 = arith.constant 0 : index
    %97 = vector.load %arg12[%c0_39, %c0_40] : memref<1x32xf32, #tpu.memory_space<vmem>>, vector<1x32xf32>
    %98 = vector.broadcast %97 : vector<1x32xf32> to vector<8x32xf32>
    %99 = arith.addf %96, %98 : vector<8x32xf32>
    %100 = arith.addf %85, %99 : vector<8x32xf32>
    %c0_41 = arith.constant 0 : index
    %c0_42 = arith.constant 0 : index
    %101 = vector.load %arg13[%c0_41, %c0_42] : memref<1x32xf32, #tpu.memory_space<vmem>>, vector<1x32xf32>
    %c0_43 = arith.constant 0 : index
    %c0_44 = arith.constant 0 : index
    %102 = vector.load %arg14[%c0_43, %c0_44] : memref<1x32xf32, #tpu.memory_space<vmem>>, vector<1x32xf32>
    %cst_45 = arith.constant dense<0.000000e+00> : vector<8xf32>
    %103 = vector.multi_reduction <add>, %100, %cst_45 [1] : vector<8x32xf32> to vector<8xf32>
    %104 = vector.shape_cast %103 : vector<8xf32> to vector<8x1xf32>
    %cst_46 = arith.constant 3.200000e+01 : f32
    %105 = vector.broadcast %cst_46 : f32 to vector<8x1xf32>
    %106 = arith.divf %104, %105 : vector<8x1xf32>
    %107 = vector.broadcast %106 : vector<8x1xf32> to vector<8x32xf32>
    %108 = arith.subf %100, %107 : vector<8x32xf32>
    %109 = arith.mulf %108, %108 : vector<8x32xf32>
    %cst_47 = arith.constant dense<0.000000e+00> : vector<8xf32>
    %110 = vector.multi_reduction <add>, %109, %cst_47 [1] : vector<8x32xf32> to vector<8xf32>
    %111 = vector.shape_cast %110 : vector<8xf32> to vector<8x1xf32>
    %cst_48 = arith.constant 3.200000e+01 : f32
    %112 = vector.broadcast %cst_48 : f32 to vector<8x1xf32>
    %113 = arith.divf %111, %112 : vector<8x1xf32>
    %cst_49 = arith.constant 9.99999974E-6 : f32
    %114 = vector.broadcast %cst_49 : f32 to vector<8x1xf32>
    %115 = arith.addf %113, %114 : vector<8x1xf32>
    %116 = math.rsqrt %115 : vector<8x1xf32>
    %117 = vector.broadcast %116 : vector<8x1xf32> to vector<8x32xf32>
    %118 = arith.mulf %108, %117 : vector<8x32xf32>
    %119 = vector.broadcast %101 : vector<1x32xf32> to vector<8x32xf32>
    %120 = arith.mulf %118, %119 : vector<8x32xf32>
    %121 = vector.broadcast %102 : vector<1x32xf32> to vector<8x32xf32>
    %122 = arith.addf %120, %121 : vector<8x32xf32>
    %123 = vector.shape_cast %122 : vector<8x32xf32> to vector<1x8x32xf32>
    %c0_50 = arith.constant 0 : index
    %c0_51 = arith.constant 0 : index
    %c0_52 = arith.constant 0 : index
    %124 = vector.load %arg15[%c0_50, %c0_51, %c0_52] : memref<1x8x32xf32, #tpu.memory_space<vmem>>, vector<1x8x32xf32>
    tpu.vector_store %arg15[%c0_50, %c0_51, %c0_52], %123 {strides = array<i32>} : memref<1x8x32xf32, #tpu.memory_space<vmem>>, vector<1x8x32xf32>,
    return
  }
  func.func @transform_0(%arg0: i32) -> (i32, i32, i32) {
    %c0_i32 = arith.constant 0 : i32
    %c0_i32_0 = arith.constant 0 : i32
    %c0_i32_1 = arith.constant 0 : i32
    return %arg0, %c0_i32, %c0_i32_0 : i32, i32, i32
  }
  func.func @transform_1(%arg0: i32) -> (i32, i32, i32) {
    %c0_i32 = arith.constant 0 : i32
    %c0_i32_0 = arith.constant 0 : i32
    %c0_i32_1 = arith.constant 0 : i32
    return %arg0, %c0_i32, %c0_i32_0 : i32, i32, i32
  }
  func.func @transform_2(%arg0: i32) -> (i32, i32) {
    %c0_i32 = arith.constant 0 : i32
    %c0_i32_0 = arith.constant 0 : i32
    %c0_i32_1 = arith.constant 0 : i32
    return %c0_i32, %c0_i32_0 : i32, i32
  }
  func.func @transform_3(%arg0: i32) -> (i32, i32) {
    %c0_i32 = arith.constant 0 : i32
    %c0_i32_0 = arith.constant 0 : i32
    %c0_i32_1 = arith.constant 0 : i32
    return %c0_i32, %c0_i32_0 : i32, i32
  }
  func.func @transform_4(%arg0: i32) -> (i32, i32) {
    %c0_i32 = arith.constant 0 : i32
    %c0_i32_0 = arith.constant 0 : i32
    %c0_i32_1 = arith.constant 0 : i32
    return %c0_i32, %c0_i32_0 : i32, i32
  }
  func.func @transform_5(%arg0: i32) -> (i32, i32) {
    %c0_i32 = arith.constant 0 : i32
    %c0_i32_0 = arith.constant 0 : i32
    %c0_i32_1 = arith.constant 0 : i32
    return %c0_i32, %c0_i32_0 : i32, i32
  }
  func.func @transform_6(%arg0: i32) -> (i32, i32) {
    %c0_i32 = arith.constant 0 : i32
    %c0_i32_0 = arith.constant 0 : i32
    %c0_i32_1 = arith.constant 0 : i32
    return %c0_i32, %c0_i32_0 : i32, i32
  }
  func.func @transform_7(%arg0: i32) -> (i32, i32) {
    %c0_i32 = arith.constant 0 : i32
    %c0_i32_0 = arith.constant 0 : i32
    %c0_i32_1 = arith.constant 0 : i32
    return %c0_i32, %c0_i32_0 : i32, i32
  }
  func.func @transform_8(%arg0: i32) -> (i32, i32) {
    %c0_i32 = arith.constant 0 : i32
    %c0_i32_0 = arith.constant 0 : i32
    %c0_i32_1 = arith.constant 0 : i32
    return %c0_i32, %c0_i32_0 : i32, i32
  }
  func.func @transform_9(%arg0: i32) -> (i32, i32) {
    %c0_i32 = arith.constant 0 : i32
    %c0_i32_0 = arith.constant 0 : i32
    %c0_i32_1 = arith.constant 0 : i32
    return %c0_i32, %c0_i32_0 : i32, i32
  }
  func.func @transform_10(%arg0: i32) -> (i32, i32) {
    %c0_i32 = arith.constant 0 : i32
    %c0_i32_0 = arith.constant 0 : i32
    %c0_i32_1 = arith.constant 0 : i32
    return %c0_i32, %c0_i32_0 : i32, i32
  }
  func.func @transform_11(%arg0: i32) -> (i32, i32) {
    %c0_i32 = arith.constant 0 : i32
    %c0_i32_0 = arith.constant 0 : i32
    %c0_i32_1 = arith.constant 0 : i32
    return %c0_i32, %c0_i32_0 : i32, i32
  }
  func.func @transform_12(%arg0: i32) -> (i32, i32) {
    %c0_i32 = arith.constant 0 : i32
    %c0_i32_0 = arith.constant 0 : i32
    %c0_i32_1 = arith.constant 0 : i32
    return %c0_i32, %c0_i32_0 : i32, i32
  }
  func.func @transform_13(%arg0: i32) -> (i32, i32) {
    %c0_i32 = arith.constant 0 : i32
    %c0_i32_0 = arith.constant 0 : i32
    %c0_i32_1 = arith.constant 0 : i32
    return %c0_i32, %c0_i32_0 : i32, i32
  }
  func.func @transform_14(%arg0: i32) -> (i32, i32, i32) {
    %c0_i32 = arith.constant 0 : i32
    %c0_i32_0 = arith.constant 0 : i32
    %c0_i32_1 = arith.constant 0 : i32
    return %arg0, %c0_i32, %c0_i32_0 : i32, i32, i32
  }
}

</mosaic_0001>

<llo_original>
// kernel: tpu_custom_call.1
$region0: #{tpu_custom_call.1}
  #allocation0 [shape = 'u32[]', space=smem, size = 0x4, offset = 0x4, fixed_abs, tag = 'smem constant byte address 0x4 - core index']
  #allocation1 [shape = 'u32[144,128]{1,0:T(1,128)}', space=vmem, size = 0x12000, scoped, tag = 'internal scratch']
  %s0 = inlined_call_operand.vmem [shape: f32[2,8,32], index: 0, kind: input, shape index: {}]
  %s1 = inlined_call_operand.hbm [shape: f32[2,1,8], index: 1, kind: input, shape index: {}]
  %s2 = inlined_call_operand.vmem [shape: bf16[32,96], index: 2, kind: input, shape index: {}]
  %s3 = inlined_call_operand.vmem [shape: f32[1,96], index: 3, kind: input, shape index: {}]
  %s4 = inlined_call_operand.vmem [shape: bf16[32,32], index: 4, kind: input, shape index: {}]
  %s5 = inlined_call_operand.vmem [shape: f32[1,32], index: 5, kind: input, shape index: {}]
  %s6 = inlined_call_operand.hbm [shape: f32[1,32], index: 6, kind: input, shape index: {}]
  %s7 = inlined_call_operand.hbm [shape: f32[1,32], index: 7, kind: input, shape index: {}]
  %s8 = inlined_call_operand.hbm [shape: bf16[32,64], index: 8, kind: input, shape index: {}]
  %s9 = inlined_call_operand.hbm [shape: f32[1,64], index: 9, kind: input, shape index: {}]
  %s10 = inlined_call_operand.vmem [shape: bf16[64,32], index: 10, kind: input, shape index: {}]
  %s11 = inlined_call_operand.vmem [shape: f32[1,32], index: 11, kind: input, shape index: {}]
  %s12 = inlined_call_operand.vmem [shape: f32[1,32], index: 12, kind: input, shape index: {}]
  %s13 = inlined_call_operand.vmem [shape: f32[1,32], index: 13, kind: input, shape index: {}]
  %s14 = inlined_call_operand.hbm [shape: f32[2,8,32], index: 14, kind: output, shape index: {}]
  %s15 = sld [smem:[#allocation0]]
  $region109: #{tpu_custom_call.1} parent=0
    _
  %s17 = ssub.s32 1, %s15
  %s18 = scalar_select 0, %s17, %s15
  $region1: #{tpu_custom_call.1} parent=0
    #allocation2 [shape = 'u8[1024]{0}', space=vmem, size = 0x400, scoped, tag = 'input window, operand 1']
    #allocation3 [shape = 's32[2]{0}', space=sflag, size = 0x8, scoped, tag = 'scoped memory for tpu_custom_call.1']
    #allocation4 [shape = 's32[2]{0}', space=sflag, size = 0x8, scoped, tag = 'scoped memory for tpu_custom_call.1']
    #allocation5 [shape = 'u8[512]{0}', space=vmem, size = 0x400, scoped, tag = 'input window, operand 6, single buffered']
    #allocation6 [shape = 's32[1]{0}', space=sflag, size = 0x4, scoped, tag = 'scoped memory for tpu_custom_call.1']
    #allocation7 [shape = 'u8[512]{0}', space=vmem, size = 0x400, scoped, tag = 'input window, operand 7, single buffered']
    #allocation8 [shape = 'u8[8192]{0}', space=vmem, size = 0x2000, scoped, tag = 'input window, operand 8, single buffered']
    #allocation9 [shape = 's32[1]{0}', space=sflag, size = 0x4, scoped, tag = 'scoped memory for tpu_custom_call.1']
    #allocation10 [shape = 'u8[512]{0}', space=vmem, size = 0x400, scoped, tag = 'input window, operand 9, single buffered']
    #allocation11 [shape = 'u8[8192]{0}', space=vmem, size = 0x2000, scoped, tag = 'output window, operand 0']
    %19 = vsyncpa [#allocation3], 0
    %s20 = scalar_lea.sflag [#allocation3], 1
    %21 = vsyncpa %s20, 0
    %22 = vsyncpa [#allocation6], 0
    %23 = vsyncpa [#allocation9], 0
    %24 = vsyncpa [#allocation4], 0
    %s25 = scalar_lea.sflag [#allocation4], 1
    %26 = vsyncpa %s25, 0
    loop: start=0, step=1, limit=4
    $region2: #{tpu_custom_call.1} parent=1 // loop_pre_header
      _
    $region3: #{tpu_custom_call.1} parent=1 // loop_header
      %s28 = sphi 0, %s32
      %p29 = scmp.ge.s32.totalorder %s28, 4
      %s38 = sphi 0, %s40
      %s41 = sphi 0, %s38
      %s42 = sphi 0, %s41
      %s58 = sphi 0, %s42
      %s64 = sphi 0, %s66
      %s67 = sphi 0, %s64
      %s68 = sphi 0, %s67
      %s84 = sphi 0, %s68
      %s88 = sphi 0, %s88
      %s90 = sphi 0, %s88
      %s91 = sphi 0, %s90
      %s105 = sphi 0, %s91
      %s109 = sphi 0, %s109
      %s111 = sphi 0, %s109
      %s112 = sphi 0, %s111
      %s126 = sphi 0, %s112
      %s130 = sphi 0, %s130
      %s132 = sphi 0, %s130
      %s133 = sphi 0, %s132
      %s147 = sphi 0, %s133
      %s151 = sphi 0, %s151
      %s153 = sphi 0, %s151
      %s154 = sphi 0, %s153
      %s168 = sphi 0, %s154
      %s172 = sphi 0, %s172
      %s174 = sphi 0, %s172
      %s175 = sphi 0, %s174
      %s189 = sphi 0, %s175
      %s193 = sphi 0, %s193
      %s195 = sphi 0, %s193
      %s196 = sphi 0, %s195
      %s210 = sphi 0, %s196
      %s214 = sphi 0, %s214
      %s216 = sphi 0, %s214
      %s217 = sphi 0, %s216
      %s231 = sphi 0, %s217
      %s235 = sphi 0, %s235
      %s237 = sphi 0, %s235
      %s238 = sphi 0, %s237
      %s252 = sphi 0, %s238
      %s256 = sphi 0, %s256
      %s258 = sphi 0, %s256
      %s259 = sphi 0, %s258
      %s273 = sphi 0, %s259
      %s277 = sphi 0, %s277
      %s279 = sphi 0, %s277
      %s280 = sphi 0, %s279
      %s294 = sphi 0, %s280
      %s298 = sphi 0, %s298
      %s300 = sphi 0, %s298
      %s301 = sphi 0, %s300
      %s315 = sphi 0, %s301
      %s319 = sphi 0, %s319
      %s321 = sphi 0, %s319
      %s322 = sphi 0, %s321
      %s336 = sphi 0, %s322
      %s342 = sphi 0, %s344
      %s345 = sphi 0, %s342
      %s346 = sphi 0, %s345
      %s362 = sphi 0, %s346
    $region4: #{tpu_custom_call.1} parent=1 // loop_header_branch
      %31 = sbr.rel (%p29) target = $region8
    $region5: #{tpu_custom_call.1} parent=1 // loop_body
      %s33 = ssub.s32 %s28, 1
      %s34 = ssub.s32 %s28, 2
      %s35 = sadd.s32 %s28, 1
      %s36 = ssub.s32 %s28, %s35
      %p37 = scmp.eq.s32.totalorder %s36, 0
      %s39 = sadd.s32 %s38, 1
      %s40 = scalar_select %p37, %s38, %s39
      %p43 = pneg %p37
      %p44 = scmp.eq.s32.totalorder %s28, 1
      %p45 = por %p43, %p44
      %p46 = scmp.ne.s32.totalorder %s38, %s41
      %p47 = scmp.eq.s32.totalorder %s28, 0
      %p48 = por %p46, %p47
      %p49 = scmp.ne.s32.totalorder %s38, %s41
      %p50 = scmp.eq.s32.totalorder %s33, 1
      %p51 = por %p49, %p50
      %p52 = scmp.ne.s32.totalorder %s41, %s42
      %p53 = scmp.eq.s32.totalorder %s33, 0
      %p54 = por %p52, %p53
      %p55 = scmp.ne.s32.totalorder %s41, %s42
      %p56 = scmp.eq.s32.totalorder %s34, 1
      %p57 = por %p55, %p56
      %p59 = scmp.ne.s32.totalorder %s42, %s58
      %p60 = scmp.eq.s32.totalorder %s34, 0
      %p61 = por %p59, %p60
      %s62 = ssub.s32 %s28, %s35
      %p63 = scmp.eq.s32.totalorder %s62, 0
      %s65 = sadd.s32 %s64, 1
      %s66 = scalar_select %p63, %s64, %s65
      %p69 = pneg %p63
      %p70 = scmp.eq.s32.totalorder %s28, 1
      %p71 = por %p69, %p70
      %p72 = scmp.ne.s32.totalorder %s64, %s67
      %p73 = scmp.eq.s32.totalorder %s28, 0
      %p74 = por %p72, %p73
      %p75 = scmp.ne.s32.totalorder %s64, %s67
      %p76 = scmp.eq.s32.totalorder %s33, 1
      %p77 = por %p75, %p76
      %p78 = scmp.ne.s32.totalorder %s67, %s68
      %p79 = scmp.eq.s32.totalorder %s33, 0
      %p80 = por %p78, %p79
      %p81 = scmp.ne.s32.totalorder %s67, %s68
      %p82 = scmp.eq.s32.totalorder %s34, 1
      %p83 = por %p81, %p82
      %p85 = scmp.ne.s32.totalorder %s68, %s84
      %p86 = scmp.eq.s32.totalorder %s34, 0
      %p87 = por %p85, %p86
      %s89 = sadd.s32 %s88, 1
      %p92 = scmp.eq.s32.totalorder %s28, 1
      %p93 = scmp.ne.s32.totalorder %s88, %s90
      %p94 = scmp.eq.s32.totalorder %s28, 0
      %p95 = por %p93, %p94
      %p96 = scmp.ne.s32.totalorder %s88, %s90
      %p97 = scmp.eq.s32.totalorder %s33, 1
      %p98 = por %p96, %p97
      %p99 = scmp.ne.s32.totalorder %s90, %s91
      %p100 = scmp.eq.s32.totalorder %s33, 0
      %p101 = por %p99, %p100
      %p102 = scmp.ne.s32.totalorder %s90, %s91
      %p103 = scmp.eq.s32.totalorder %s34, 1
      %p104 = por %p102, %p103
      %p106 = scmp.ne.s32.totalorder %s91, %s105
      %p107 = scmp.eq.s32.totalorder %s34, 0
      %p108 = por %p106, %p107
      %s110 = sadd.s32 %s109, 1
      %p113 = scmp.eq.s32.totalorder %s28, 1
      %p114 = scmp.ne.s32.totalorder %s109, %s111
      %p115 = scmp.eq.s32.totalorder %s28, 0
      %p116 = por %p114, %p115
      %p117 = scmp.ne.s32.totalorder %s109, %s111
      %p118 = scmp.eq.s32.totalorder %s33, 1
      %p119 = por %p117, %p118
      %p120 = scmp.ne.s32.totalorder %s111, %s112
      %p121 = scmp.eq.s32.totalorder %s33, 0
      %p122 = por %p120, %p121
      %p123 = scmp.ne.s32.totalorder %s111, %s112
      %p124 = scmp.eq.s32.totalorder %s34, 1
      %p125 = por %p123, %p124
      %p127 = scmp.ne.s32.totalorder %s112, %s126
      %p128 = scmp.eq.s32.totalorder %s34, 0
      %p129 = por %p127, %p128
      %s131 = sadd.s32 %s130, 1
      %p134 = scmp.eq.s32.totalorder %s28, 1
      %p135 = scmp.ne.s32.totalorder %s130, %s132
      %p136 = scmp.eq.s32.totalorder %s28, 0
      %p137 = por %p135, %p136
      %p138 = scmp.ne.s32.totalorder %s130, %s132
      %p139 = scmp.eq.s32.totalorder %s33, 1
      %p140 = por %p138, %p139
      %p141 = scmp.ne.s32.totalorder %s132, %s133
      %p142 = scmp.eq.s32.totalorder %s33, 0
      %p143 = por %p141, %p142
      %p144 = scmp.ne.s32.totalorder %s132, %s133
      %p145 = scmp.eq.s32.totalorder %s34, 1
      %p146 = por %p144, %p145
      %p148 = scmp.ne.s32.totalorder %s133, %s147
      %p149 = scmp.eq.s32.totalorder %s34, 0
      %p150 = por %p148, %p149
      %s152 = sadd.s32 %s151, 1
      %p155 = scmp.eq.s32.totalorder %s28, 1
      %p156 = scmp.ne.s32.totalorder %s151, %s153
      %p157 = scmp.eq.s32.totalorder %s28, 0
      %p158 = por %p156, %p157
      %p159 = scmp.ne.s32.totalorder %s151, %s153
      %p160 = scmp.eq.s32.totalorder %s33, 1
      %p161 = por %p159, %p160
      %p162 = scmp.ne.s32.totalorder %s153, %s154
      %p163 = scmp.eq.s32.totalorder %s33, 0
      %p164 = por %p162, %p163
      %p165 = scmp.ne.s32.totalorder %s153, %s154
      %p166 = scmp.eq.s32.totalorder %s34, 1
      %p167 = por %p165, %p166
      %p169 = scmp.ne.s32.totalorder %s154, %s168
      %p170 = scmp.eq.s32.totalorder %s34, 0
      %p171 = por %p169, %p170
      %s173 = sadd.s32 %s172, 1
      %p176 = scmp.eq.s32.totalorder %s28, 1
      %p177 = scmp.ne.s32.totalorder %s172, %s174
      %p178 = scmp.eq.s32.totalorder %s28, 0
      %p179 = por %p177, %p178
      %p180 = scmp.ne.s32.totalorder %s172, %s174
      %p181 = scmp.eq.s32.totalorder %s33, 1
      %p182 = por %p180, %p181
      %p183 = scmp.ne.s32.totalorder %s174, %s175
      %p184 = scmp.eq.s32.totalorder %s33, 0
      %p185 = por %p183, %p184
      %p186 = scmp.ne.s32.totalorder %s174, %s175
      %p187 = scmp.eq.s32.totalorder %s34, 1
      %p188 = por %p186, %p187
      %p190 = scmp.ne.s32.totalorder %s175, %s189
      %p191 = scmp.eq.s32.totalorder %s34, 0
      %p192 = por %p190, %p191
      %s194 = sadd.s32 %s193, 1
      %p197 = scmp.eq.s32.totalorder %s28, 1
      %p198 = scmp.ne.s32.totalorder %s193, %s195
      %p199 = scmp.eq.s32.totalorder %s28, 0
      %p200 = por %p198, %p199
      %p201 = scmp.ne.s32.totalorder %s193, %s195
      %p202 = scmp.eq.s32.totalorder %s33, 1
      %p203 = por %p201, %p202
      %p204 = scmp.ne.s32.totalorder %s195, %s196
      %p205 = scmp.eq.s32.totalorder %s33, 0
      %p206 = por %p204, %p205
      %p207 = scmp.ne.s32.totalorder %s195, %s196
      %p208 = scmp.eq.s32.totalorder %s34, 1
      %p209 = por %p207, %p208
      %p211 = scmp.ne.s32.totalorder %s196, %s210
      %p212 = scmp.eq.s32.totalorder %s34, 0
      %p213 = por %p211, %p212
      %s215 = sadd.s32 %s214, 1
      %p218 = scmp.eq.s32.totalorder %s28, 1
      %p219 = scmp.ne.s32.totalorder %s214, %s216
      %p220 = scmp.eq.s32.totalorder %s28, 0
      %p221 = por %p219, %p220
      %p222 = scmp.ne.s32.totalorder %s214, %s216
      %p223 = scmp.eq.s32.totalorder %s33, 1
      %p224 = por %p222, %p223
      %p225 = scmp.ne.s32.totalorder %s216, %s217
      %p226 = scmp.eq.s32.totalorder %s33, 0
      %p227 = por %p225, %p226
      %p228 = scmp.ne.s32.totalorder %s216, %s217
      %p229 = scmp.eq.s32.totalorder %s34, 1
      %p230 = por %p228, %p229
      %p232 = scmp.ne.s32.totalorder %s217, %s231
      %p233 = scmp.eq.s32.totalorder %s34, 0
      %p234 = por %p232, %p233
      %s236 = sadd.s32 %s235, 1
      %p239 = scmp.eq.s32.totalorder %s28, 1
      %p240 = scmp.ne.s32.totalorder %s235, %s237
      %p241 = scmp.eq.s32.totalorder %s28, 0
      %p242 = por %p240, %p241
      %p243 = scmp.ne.s32.totalorder %s235, %s237
      %p244 = scmp.eq.s32.totalorder %s33, 1
      %p245 = por %p243, %p244
      %p246 = scmp.ne.s32.totalorder %s237, %s238
      %p247 = scmp.eq.s32.totalorder %s33, 0
      %p248 = por %p246, %p247
      %p249 = scmp.ne.s32.totalorder %s237, %s238
      %p250 = scmp.eq.s32.totalorder %s34, 1
      %p251 = por %p249, %p250
      %p253 = scmp.ne.s32.totalorder %s238, %s252
      %p254 = scmp.eq.s32.totalorder %s34, 0
      %p255 = por %p253, %p254
      %s257 = sadd.s32 %s256, 1
      %p260 = scmp.eq.s32.totalorder %s28, 1
      %p261 = scmp.ne.s32.totalorder %s256, %s258
      %p262 = scmp.eq.s32.totalorder %s28, 0
      %p263 = por %p261, %p262
      %p264 = scmp.ne.s32.totalorder %s256, %s258
      %p265 = scmp.eq.s32.totalorder %s33, 1
      %p266 = por %p264, %p265
      %p267 = scmp.ne.s32.totalorder %s258, %s259
      %p268 = scmp.eq.s32.totalorder %s33, 0
      %p269 = por %p267, %p268
      %p270 = scmp.ne.s32.totalorder %s258, %s259
      %p271 = scmp.eq.s32.totalorder %s34, 1
      %p272 = por %p270, %p271
      %p274 = scmp.ne.s32.totalorder %s259, %s273
      %p275 = scmp.eq.s32.totalorder %s34, 0
      %p276 = por %p274, %p275
      %s278 = sadd.s32 %s277, 1
      %p281 = scmp.eq.s32.totalorder %s28, 1
      %p282 = scmp.ne.s32.totalorder %s277, %s279
      %p283 = scmp.eq.s32.totalorder %s28, 0
      %p284 = por %p282, %p283
      %p285 = scmp.ne.s32.totalorder %s277, %s279
      %p286 = scmp.eq.s32.totalorder %s33, 1
      %p287 = por %p285, %p286
      %p288 = scmp.ne.s32.totalorder %s279, %s280
      %p289 = scmp.eq.s32.totalorder %s33, 0
      %p290 = por %p288, %p289
      %p291 = scmp.ne.s32.totalorder %s279, %s280
      %p292 = scmp.eq.s32.totalorder %s34, 1
      %p293 = por %p291, %p292
      %p295 = scmp.ne.s32.totalorder %s280, %s294
      %p296 = scmp.eq.s32.totalorder %s34, 0
      %p297 = por %p295, %p296
      %s299 = sadd.s32 %s298, 1
      %p302 = scmp.eq.s32.totalorder %s28, 1
      %p303 = scmp.ne.s32.totalorder %s298, %s300
      %p304 = scmp.eq.s32.totalorder %s28, 0
      %p305 = por %p303, %p304
      %p306 = scmp.ne.s32.totalorder %s298, %s300
      %p307 = scmp.eq.s32.totalorder %s33, 1
      %p308 = por %p306, %p307
      %p309 = scmp.ne.s32.totalorder %s300, %s301
      %p310 = scmp.eq.s32.totalorder %s33, 0
      %p311 = por %p309, %p310
      %p312 = scmp.ne.s32.totalorder %s300, %s301
      %p313 = scmp.eq.s32.totalorder %s34, 1
      %p314 = por %p312, %p313
      %p316 = scmp.ne.s32.totalorder %s301, %s315
      %p317 = scmp.eq.s32.totalorder %s34, 0
      %p318 = por %p316, %p317
      %s320 = sadd.s32 %s319, 1
      %p323 = scmp.eq.s32.totalorder %s28, 1
      %p324 = scmp.ne.s32.totalorder %s319, %s321
      %p325 = scmp.eq.s32.totalorder %s28, 0
      %p326 = por %p324, %p325
      %p327 = scmp.ne.s32.totalorder %s319, %s321
      %p328 = scmp.eq.s32.totalorder %s33, 1
      %p329 = por %p327, %p328
      %p330 = scmp.ne.s32.totalorder %s321, %s322
      %p331 = scmp.eq.s32.totalorder %s33, 0
      %p332 = por %p330, %p331
      %p333 = scmp.ne.s32.totalorder %s321, %s322
      %p334 = scmp.eq.s32.totalorder %s34, 1
      %p335 = por %p333, %p334
      %p337 = scmp.ne.s32.totalorder %s322, %s336
      %p338 = scmp.eq.s32.totalorder %s34, 0
      %p339 = por %p337, %p338
      %s340 = ssub.s32 %s28, %s35
      %p341 = scmp.eq.s32.totalorder %s340, 0
      %s343 = sadd.s32 %s342, 1
      %s344 = scalar_select %p341, %s342, %s343
      %p347 = pneg %p341
      %p348 = scmp.eq.s32.totalorder %s28, 1
      %p349 = por %p347, %p348
      %p350 = scmp.ne.s32.totalorder %s342, %s345
      %p351 = scmp.eq.s32.totalorder %s28, 0
      %p352 = por %p350, %p351
      %p353 = scmp.ne.s32.totalorder %s342, %s345
      %p354 = scmp.eq.s32.totalorder %s33, 1
      %p355 = por %p353, %p354
      %p356 = scmp.ne.s32.totalorder %s345, %s346
      %p357 = scmp.eq.s32.totalorder %s33, 0
      %p358 = por %p356, %p357
      %p359 = scmp.ne.s32.totalorder %s345, %s346
      %p360 = scmp.eq.s32.totalorder %s34, 1
      %p361 = por %p359, %p360
      %p363 = scmp.ne.s32.totalorder %s346, %s362
      %p364 = scmp.eq.s32.totalorder %s34, 0
      %p365 = por %p363, %p364
      %p366 = scmp.le.s32.totalorder 1, %s28
      %p367 = scmp.lt.s32.totalorder %s28, 3
      %p368 = pnand %p366, %p367
      %p369 = pneg %p368
      // Predicated region
      $region9: #{tpu_custom_call.1} parent=5 // pred_check
        _
      $region10: #{tpu_custom_call.1} parent=5 // pred_check_branch
        %371 = sbr.rel (%p368) target = $region12
      $region11: #{tpu_custom_call.1} parent=5 // pred_region
        %s372 = ssub.s32 %s28, 1
        // Predicated region
        $region13: #{tpu_custom_call.1} parent=11 // pred_check
          %p373 = pneg %p101
        $region14: #{tpu_custom_call.1} parent=11 // pred_check_branch
          %375 = sbr.rel (%p373) target = $region16
        $region15: #{tpu_custom_call.1} parent=11 // pred_region
          _
        $region16: #{tpu_custom_call.1} parent=11 // pred_fallthru
          _
        // Predicated region
        $region17: #{tpu_custom_call.1} parent=11 // pred_check
          %p376 = pneg %p122
        $region18: #{tpu_custom_call.1} parent=11 // pred_check_branch
          %378 = sbr.rel (%p376) target = $region20
        $region19: #{tpu_custom_call.1} parent=11 // pred_region
          _
        $region20: #{tpu_custom_call.1} parent=11 // pred_fallthru
          _
        // Predicated region
        $region21: #{tpu_custom_call.1} parent=11 // pred_check
          %p379 = pneg %p143
        $region22: #{tpu_custom_call.1} parent=11 // pred_check_branch
          %381 = sbr.rel (%p379) target = $region24
        $region23: #{tpu_custom_call.1} parent=11 // pred_region
          _
        $region24: #{tpu_custom_call.1} parent=11 // pred_fallthru
          _
        // Predicated region
        $region25: #{tpu_custom_call.1} parent=11 // pred_check
          %p382 = pneg %p164
        $region26: #{tpu_custom_call.1} parent=11 // pred_check_branch
          %384 = sbr.rel (%p382) target = $region28
        $region27: #{tpu_custom_call.1} parent=11 // pred_region
          _
        $region28: #{tpu_custom_call.1} parent=11 // pred_fallthru
          _
        // Predicated region
        $region29: #{tpu_custom_call.1} parent=11 // pred_check
          %p385 = pneg %p185
        $region30: #{tpu_custom_call.1} parent=11 // pred_check_branch
          %387 = sbr.rel (%p385) target = $region32
        $region31: #{tpu_custom_call.1} parent=11 // pred_region
          %s389 = ssub.s32 16, 16
          %390 = vsyncadd [#allocation6], %s389
          %s392 = sshll.u32 [#allocation5], 4
          %s393 = int_to_ptr.vmem [resolvable:$true] %s392
          %395 = dma.hbm_to_vmem [thread:$0]  %s6, 16, %s393, [#allocation6]
        $region32: #{tpu_custom_call.1} parent=11 // pred_fallthru
          _
        // Predicated region
        $region33: #{tpu_custom_call.1} parent=11 // pred_check
          %p396 = pneg %p206
        $region34: #{tpu_custom_call.1} parent=11 // pred_check_branch
          %398 = sbr.rel (%p396) target = $region36
        $region35: #{tpu_custom_call.1} parent=11 // pred_region
          %s400 = ssub.s32 16, 16
          %401 = vsyncadd [#allocation6], %s400
          %s403 = sshll.u32 [#allocation7], 4
          %s404 = int_to_ptr.vmem [resolvable:$true] %s403
          %406 = dma.hbm_to_vmem [thread:$0]  %s7, 16, %s404, [#allocation6]
        $region36: #{tpu_custom_call.1} parent=11 // pred_fallthru
          _
        // Predicated region
        $region37: #{tpu_custom_call.1} parent=11 // pred_check
          %p407 = pneg %p227
        $region38: #{tpu_custom_call.1} parent=11 // pred_check_branch
          %409 = sbr.rel (%p407) target = $region40
        $region39: #{tpu_custom_call.1} parent=11 // pred_region
          %s411 = ssub.s32 256, 256
          %412 = vsyncadd [#allocation9], %s411
          %s413 = sshll.u32 [#allocation8], 4
          %s414 = int_to_ptr.vmem [resolvable:$true] %s413
          %419 = dma.hbm_to_vmem [thread:$0]  %s8, 256, %s414, [#allocation9], 64, 64, 4
        $region40: #{tpu_custom_call.1} parent=11 // pred_fallthru
          _
        // Predicated region
        $region41: #{tpu_custom_call.1} parent=11 // pred_check
          %p420 = pneg %p248
        $region42: #{tpu_custom_call.1} parent=11 // pred_check_branch
          %422 = sbr.rel (%p420) target = $region44
        $region43: #{tpu_custom_call.1} parent=11 // pred_region
          %s424 = ssub.s32 16, 16
          %425 = vsyncadd [#allocation9], %s424
          %s427 = sshll.u32 [#allocation10], 4
          %s428 = int_to_ptr.vmem [resolvable:$true] %s427
          %430 = dma.hbm_to_vmem [thread:$0]  %s9, 16, %s428, [#allocation9]
        $region44: #{tpu_custom_call.1} parent=11 // pred_fallthru
          _
        // Predicated region
        $region45: #{tpu_custom_call.1} parent=11 // pred_check
          %p431 = pneg %p269
        $region46: #{tpu_custom_call.1} parent=11 // pred_check_branch
          %433 = sbr.rel (%p431) target = $region48
        $region47: #{tpu_custom_call.1} parent=11 // pred_region
          _
        $region48: #{tpu_custom_call.1} parent=11 // pred_fallthru
          _
        // Predicated region
        $region49: #{tpu_custom_call.1} parent=11 // pred_check
          %p434 = pneg %p290
        $region50: #{tpu_custom_call.1} parent=11 // pred_check_branch
          %436 = sbr.rel (%p434) target = $region52
        $region51: #{tpu_custom_call.1} parent=11 // pred_region
          _
        $region52: #{tpu_custom_call.1} parent=11 // pred_fallthru
          _
        // Predicated region
        $region53: #{tpu_custom_call.1} parent=11 // pred_check
          %p437 = pneg %p311
        $region54: #{tpu_custom_call.1} parent=11 // pred_check_branch
          %439 = sbr.rel (%p437) target = $region56
        $region55: #{tpu_custom_call.1} parent=11 // pred_region
          _
        $region56: #{tpu_custom_call.1} parent=11 // pred_fallthru
          _
        // Predicated region
        $region57: #{tpu_custom_call.1} parent=11 // pred_check
          %p440 = pneg %p332
        $region58: #{tpu_custom_call.1} parent=11 // pred_check_branch
          %442 = sbr.rel (%p440) target = $region60
        $region59: #{tpu_custom_call.1} parent=11 // pred_region
          _
        $region60: #{tpu_custom_call.1} parent=11 // pred_fallthru
          _
      $region12: #{tpu_custom_call.1} parent=5 // pred_fallthru
        _
      %p443 = scmp.lt.s32.totalorder %s28, 2
      // Predicated region
      $region61: #{tpu_custom_call.1} parent=5 // pred_check
        %p444 = pneg %p443
      $region62: #{tpu_custom_call.1} parent=5 // pred_check_branch
        %446 = sbr.rel (%p444) target = $region64
      $region63: #{tpu_custom_call.1} parent=5 // pred_region
        // Predicated region
        $region65: #{tpu_custom_call.1} parent=63 // pred_check
          %p447 = pneg %p48
        $region66: #{tpu_custom_call.1} parent=63 // pred_check_branch
          %449 = sbr.rel (%p447) target = $region68
        $region67: #{tpu_custom_call.1} parent=63 // pred_region
          %p450 = scmp.lt.s32.totalorder %s28, 1
          %s451 = scalar_select %p450, %s28, 1
          %s452 = smul.addr %s451, 8
          %s453 = scalar_lea.vmem %s0, %s452
        $region68: #{tpu_custom_call.1} parent=63 // pred_fallthru
          _
        // Predicated region
        $region69: #{tpu_custom_call.1} parent=63 // pred_check
          %p454 = pneg %p74
        $region70: #{tpu_custom_call.1} parent=63 // pred_check_branch
          %456 = sbr.rel (%p454) target = $region72
        $region71: #{tpu_custom_call.1} parent=63 // pred_region
          %s457 = sand.u32 %s64, 1
          %s458 = scalar_lea.sflag [#allocation3], %s457
          %s459 = sand.u32 %s64, 1
          %s460 = scalar_lea.vmem [#allocation2], %s459
          %s462 = ssub.s32 16, 16
          %463 = vsyncadd %s458, %s462
          %s464 = smul.addr %s28, 16
          %s465 = scalar_lea.hbm %s1, %s464
          %s467 = sshll.u32 %s460, 4
          %s468 = int_to_ptr.vmem [resolvable:$true] %s467
          %470 = dma.hbm_to_vmem [thread:$0]  %s465, 16, %s468, %s458
        $region72: #{tpu_custom_call.1} parent=63 // pred_fallthru
          _
      $region64: #{tpu_custom_call.1} parent=5 // pred_fallthru
        _
      %p471 = scmp.le.s32.totalorder 1, %s28
      %p472 = scmp.lt.s32.totalorder %s28, 3
      %p473 = pnand %p471, %p472
      %p474 = pneg %p473
      // Predicated region
      $region73: #{tpu_custom_call.1} parent=5 // pred_check
        _
      $region74: #{tpu_custom_call.1} parent=5 // pred_check_branch
        %476 = sbr.rel (%p473) target = $region76
      $region75: #{tpu_custom_call.1} parent=5 // pred_region
        %s477 = ssub.s32 %s28, 1
        %s478 = sand.u32 %s67, 1
        %s479 = scalar_lea.sflag [#allocation3], %s478
        %s480 = sand.u32 %s67, 1
        %s481 = scalar_lea.vmem [#allocation2], %s480
        // Predicated region
        $region77: #{tpu_custom_call.1} parent=75 // pred_check
          %p482 = pneg %p80
        $region78: #{tpu_custom_call.1} parent=75 // pred_check_branch
          %484 = sbr.rel (%p482) target = $region80
        $region79: #{tpu_custom_call.1} parent=75 // pred_region
          %485 = dma.done %s479, 16
        $region80: #{tpu_custom_call.1} parent=75 // pred_fallthru
          _
        // Predicated region
        $region81: #{tpu_custom_call.1} parent=75 // pred_check
          %p486 = pneg %p185
        $region82: #{tpu_custom_call.1} parent=75 // pred_check_branch
          %488 = sbr.rel (%p486) target = $region84
        $region83: #{tpu_custom_call.1} parent=75 // pred_region
          %489 = dma.done [#allocation6], 16
        $region84: #{tpu_custom_call.1} parent=75 // pred_fallthru
          _
        // Predicated region
        $region85: #{tpu_custom_call.1} parent=75 // pred_check
          %p490 = pneg %p206
        $region86: #{tpu_custom_call.1} parent=75 // pred_check_branch
          %492 = sbr.rel (%p490) target = $region88
        $region87: #{tpu_custom_call.1} parent=75 // pred_region
          %493 = dma.done [#allocation6], 16
        $region88: #{tpu_custom_call.1} parent=75 // pred_fallthru
          _
        // Predicated region
        $region89: #{tpu_custom_call.1} parent=75 // pred_check
          %p494 = pneg %p227
        $region90: #{tpu_custom_call.1} parent=75 // pred_check_branch
          %496 = sbr.rel (%p494) target = $region92
        $region91: #{tpu_custom_call.1} parent=75 // pred_region
          %497 = dma.done [#allocation9], 256
        $region92: #{tpu_custom_call.1} parent=75 // pred_fallthru
          _
        // Predicated region
        $region93: #{tpu_custom_call.1} parent=75 // pred_check
          %p498 = pneg %p248
        $region94: #{tpu_custom_call.1} parent=75 // pred_check_branch
          %500 = sbr.rel (%p498) target = $region96
        $region95: #{tpu_custom_call.1} parent=75 // pred_region
          %501 = dma.done [#allocation9], 16
        $region96: #{tpu_custom_call.1} parent=75 // pred_fallthru
          _
        %p502 = scmp.lt.s32.totalorder %s33, 1
        %s503 = scalar_select %p502, %s33, 1
        %s504 = smul.addr %s503, 8
        %s505 = scalar_lea.vmem %s0, %s504
        %p506 = pneg %p54
        %p507 = pneg %p51
        %s508 = sand.u32 %s67, 1
        %s509 = scalar_lea.sflag [#allocation3], %s508
        %s510 = sand.u32 %s67, 1
        %s511 = scalar_lea.vmem [#allocation2], %s510
        %p512 = pneg %p80
        %p513 = pneg %p77
        %p514 = pneg %p101
        %p515 = pneg %p98
        %p516 = pneg %p122
        %p517 = pneg %p119
        %p518 = pneg %p143
        %p519 = pneg %p140
        %p520 = pneg %p164
        %p521 = pneg %p161
        %p522 = pneg %p185
        %p523 = pneg %p182
        %p524 = pneg %p206
        %p525 = pneg %p203
        %p526 = pneg %p227
        %p527 = pneg %p224
        %p528 = pneg %p248
        %p529 = pneg %p245
        %p530 = pneg %p269
        %p531 = pneg %p266
        %p532 = pneg %p290
        %p533 = pneg %p287
        %p534 = pneg %p311
        %p535 = pneg %p308
        %p536 = pneg %p332
        %p537 = pneg %p329
        %p538 = pneg %p358
        %p539 = pneg %p355
        %s540 = sand.u32 %s345, 1
        %s541 = scalar_lea.sflag [#allocation4], %s540
        %s542 = sand.u32 %s345, 1
        %s543 = smul.addr %s542, 8
        %s544 = scalar_lea.vmem [#allocation11], %s543
        %p545 = scmp.lt.s32.totalorder %s33, 1
        %s546 = scalar_select %p545, %s33, 1
        %s547 = smul.addr %s546, 8
        %s548 = scalar_lea.vmem %s0, %s547
        %v550 = vld [vmem:[%s548] sm:$0xff]
        %v551 = vpack.c.bf16 %v550, %v550
        %v552 = vld [vmem:[%s2] sm:$0xf]
        %v553 = vld [vmem:[%s2 + $0x4] sm:$0xf]
        %v554 = vld [vmem:[%s2 + $0x8] sm:$0xf]
        %v555 = vld [vmem:[%s2 + $0xc] sm:$0xf]
        %v556 = vld [vmem:[%s3] sm:$0x1]
        %v558 = vlaneseq
        %v559 = vshrl.u32 %v558, 7
        %v560 = vsub.s32 0, %v559
        %v561 = vrot.slane %v556, %v560
        %v567 = vunpack.c.l.b16 %v552
        %v568 = vunpack.c.l.b16 %v553
        %v569 = vunpack.c.l.b16 %v554
        %v570 = vunpack.c.l.b16 %v555
        %v571 = vpack.c.b16 %v568, %v567
        %v572 = vpack.c.b16 %v570, %v569
        %vm575 = vcmask 261120
        %v577 = vsel %vm575, %v551, 0
        %579 = vmatprep.subr.bf16.mxu0 0
        %580 = vmatpush1.bf16.msra.mxu0 0
        %581 = vmatprep.subr.bf16.mxu0 0
        %582 = vmatpush1.bf16.msra.mxu0 0
        %583 = vmatprep.subr.bf16.mxu0 0
        %584 = vmatpush1.bf16.msra.mxu0 0
        %585 = vmatprep.subr.bf16.mxu0 0
        %586 = vmatpush1.bf16.msra.mxu0 0
        %587 = vmatprep.subr.bf16.mxu0 0
        %588 = vmatpush1.bf16.msra.mxu0 0
        %589 = vmatprep.subr.bf16.mxu0 0
        %590 = vmatpush1.bf16.msra.mxu0 0
        %591 = vmatprep.subr.bf16.mxu0 0
        %592 = vmatpush1.bf16.msra.mxu0 %v572
        %593 = vmatprep.subr.bf16.mxu0 0
        %594 = vmatpush1.bf16.msra.mxu0 %v571
        %595 = vmatprep.subr.bf16.mxu0 0
        %596 = vmatpush2.bf16.msra.mxu0 0
        %597 = vmatprep.subr.bf16.mxu0 0
        %598 = vmatpush2.bf16.msra.mxu0 0
        %599 = vmatprep.subr.bf16.mxu0 0
        %600 = vmatpush2.bf16.msra.mxu0 0
        %601 = vmatprep.subr.bf16.mxu0 0
        %602 = vmatpush2.bf16.msra.mxu0 0
        %603 = vmatprep.subr.bf16.mxu0 0
        %604 = vmatpush2.bf16.msra.mxu0 0
        %605 = vmatprep.subr.bf16.mxu0 0
        %606 = vmatpush2.bf16.msra.mxu0 0
        %607 = vmatprep.subr.bf16.mxu0 0
        %608 = vmatpush2.bf16.msra.mxu0 0
        %609 = vmatprep.subr.bf16.mxu0 0
        %610 = vmatpush2.bf16.msra.mxu0 0
        %611 = vmatprep.mubr.bf16.mxu0 0
        %612 = vmatmul.mubr.bf16.gmra.mxu0 %v577
        %v613 = vpop.f32.mrf.mxu0
        %v614 = vadd.f32 %v561, %v613
        %v615 = vpop.f32.mrf.mxu0
        %v616 = vpop.f32.mrf.mxu0
        %v617 = vpop.f32.mrf.mxu0
        %618 = vdwg.mxu0
        %v619 = vpack.c.bf16 %v614, %v614
        %v620 = vld [vmem:[%s481] sm:$0x1]
        %622 = vrot.lane.b32.xlu0 %v619, 112
        %v623 = vpop.permute.xlu0 %622
        %624 = vrot.lane.b32.xlu0 %v619, 96
        %v625 = vpop.permute.xlu0 %624
        %vm626 = vcmask 130048
        %v628 = vsel %vm626, %v619, 0
        %v631 = vsel %vm626, %v625, 0
        %633 = vmatprep.subr.bf16.mxu0 0
        %634 = vmatpush1.bf16.xpose.msra.mxu0 0
        %635 = vmatprep.subr.bf16.mxu0 0
        %636 = vmatpush1.bf16.xpose.msra.mxu0 0
        %637 = vmatprep.subr.bf16.mxu0 0
        %638 = vmatpush1.bf16.xpose.msra.mxu0 0
        %639 = vmatprep.subr.bf16.mxu0 0
        %640 = vmatpush1.bf16.xpose.msra.mxu0 0
        %641 = vmatprep.subr.bf16.mxu0 0
        %642 = vmatpush1.bf16.xpose.msra.mxu0 0
        %643 = vmatprep.subr.bf16.mxu0 0
        %644 = vmatpush1.bf16.xpose.msra.mxu0 0
        %645 = vmatprep.subr.bf16.mxu0 0
        %646 = vmatpush1.bf16.xpose.msra.mxu0 0
        %647 = vmatprep.subr.bf16.mxu0 0
        %648 = vmatpush1.bf16.xpose.msra.mxu0 %v631
        %649 = vmatprep.subr.bf16.mxu0 0
        %650 = vmatpush2.bf16.xpose.msra.mxu0 0
        %651 = vmatprep.subr.bf16.mxu0 0
        %652 = vmatpush2.bf16.xpose.msra.mxu0 0
        %653 = vmatprep.subr.bf16.mxu0 0
        %654 = vmatpush2.bf16.xpose.msra.mxu0 0
        %655 = vmatprep.subr.bf16.mxu0 0
        %656 = vmatpush2.bf16.xpose.msra.mxu0 0
        %657 = vmatprep.subr.bf16.mxu0 0
        %658 = vmatpush2.bf16.xpose.msra.mxu0 0
        %659 = vmatprep.subr.bf16.mxu0 0
        %660 = vmatpush2.bf16.xpose.msra.mxu0 0
        %661 = vmatprep.subr.bf16.mxu0 0
        %662 = vmatpush2.bf16.xpose.msra.mxu0 0
        %663 = vmatprep.subr.bf16.mxu0 0
        %664 = vmatpush2.bf16.xpose.msra.mxu0 0
        %665 = vmatprep.mubr.bf16.mxu0 0
        %666 = vmatmul.mubr.bf16.gmra.mxu0 %v628
        %v667 = vpop.f32.mrf.mxu0
        %v668 = vadd.f32 0.0, %v667
        %v669 = vpop.f32.mrf.mxu0
        %v670 = vpop.f32.mrf.mxu0
        %v671 = vpop.f32.mrf.mxu0
        %672 = vdwg.mxu0
        %673 = vrot.lane.b32.xlu0 %v623, 96
        %v674 = vpop.permute.xlu0 %673
        %v676 = vsel %vm626, %v623, 0
        %v679 = vsel %vm626, %v674, 0
        %681 = vmatprep.subr.bf16.mxu0 0
        %682 = vmatpush1.bf16.xpose.msra.mxu0 0
        %683 = vmatprep.subr.bf16.mxu0 0
        %684 = vmatpush1.bf16.xpose.msra.mxu0 0
        %685 = vmatprep.subr.bf16.mxu0 0
        %686 = vmatpush1.bf16.xpose.msra.mxu0 0
        %687 = vmatprep.subr.bf16.mxu0 0
        %688 = vmatpush1.bf16.xpose.msra.mxu0 0
        %689 = vmatprep.subr.bf16.mxu0 0
        %690 = vmatpush1.bf16.xpose.msra.mxu0 0
        %691 = vmatprep.subr.bf16.mxu0 0
        %692 = vmatpush1.bf16.xpose.msra.mxu0 0
        %693 = vmatprep.subr.bf16.mxu0 0
        %694 = vmatpush1.bf16.xpose.msra.mxu0 0
        %695 = vmatprep.subr.bf16.mxu0 0
        %696 = vmatpush1.bf16.xpose.msra.mxu0 %v679
        %697 = vmatprep.subr.bf16.mxu0 0
        %698 = vmatpush2.bf16.xpose.msra.mxu0 0
        %699 = vmatprep.subr.bf16.mxu0 0
        %700 = vmatpush2.bf16.xpose.msra.mxu0 0
        %701 = vmatprep.subr.bf16.mxu0 0
        %702 = vmatpush2.bf16.xpose.msra.mxu0 0
        %703 = vmatprep.subr.bf16.mxu0 0
        %704 = vmatpush2.bf16.xpose.msra.mxu0 0
        %705 = vmatprep.subr.bf16.mxu0 0
        %706 = vmatpush2.bf16.xpose.msra.mxu0 0
        %707 = vmatprep.subr.bf16.mxu0 0
        %708 = vmatpush2.bf16.xpose.msra.mxu0 0
        %709 = vmatprep.subr.bf16.mxu0 0
        %710 = vmatpush2.bf16.xpose.msra.mxu0 0
        %711 = vmatprep.subr.bf16.mxu0 0
        %712 = vmatpush2.bf16.xpose.msra.mxu0 0
        %713 = vmatprep.mubr.bf16.mxu0 0
        %714 = vmatmul.mubr.bf16.gmra.mxu0 %v676
        %v715 = vpop.f32.mrf.mxu0
        %v716 = vadd.f32 0.0, %v715
        %v717 = vpop.f32.mrf.mxu0
        %v718 = vpop.f32.mrf.mxu0
        %v719 = vpop.f32.mrf.mxu0
        %720 = vdwg.mxu0
        %v721 = vmul.f32 %v668, 0.25
        %v722 = vmul.f32 %v716, 0.25
        %v724 = vlaneseq
        %v725 = vshrl.u32 %v724, 7
        %v726 = vsub.s32 0, %v725
        %v727 = vrot.slane %v620, %v726
        %v729 = vadd.f32 %v721, %v727
        %v730 = vadd.f32 %v722, %v727
        %vm731 = vcmask 64512
        %v732 = vsel %vm731, %v729, -inf
        %733 = vmax.xlane.f32.xlu0 %v732
        %v734 = vpop.xlane.xlu0 %733
        %v735 = vsel %vm731, %v730, -inf
        %736 = vmax.xlane.f32.xlu0 %v735
        %v737 = vpop.xlane.xlu0 %736
        %v738 = vsub.f32 %v729, %v734
        %v739 = vsub.f32 %v730, %v737
        %v740 = vmul.f32 %v738, 1.442695
        %v741 = vpow.pop %v740
        %v742 = vmul.f32 %v739, 1.442695
        %v743 = vpow.pop %v742
        %v744 = vsel %vm731, %v741, 0.0
        %745 = vadd.xlane.f32.xlu0 %v744
        %v746 = vpop.xlane.xlu0 %745
        %v747 = vsel %vm731, %v743, 0.0
        %748 = vadd.xlane.f32.xlu0 %v747
        %v749 = vpop.xlane.xlu0 %748
        %v750 = vrcp.pop %v746
        %v751 = vrcp.pop %v749
        %v752 = vmul.f32 %v741, %v750
        %v753 = vmul.f32 %v743, %v751
        %v754 = vpack.c.bf16 %v752, %v752
        %v755 = vpack.c.bf16 %v753, %v753
        %756 = vrot.lane.b32.xlu0 %v619, 64
        %v757 = vpop.permute.xlu0 %756
        %v759 = vsel %vm731, %v754, 0
        %vm761 = vcmask 1043456
        %v763 = vsel %vm761, %v757, 0
        %765 = vmatprep.subr.bf16.mxu0 0
        %766 = vmatpush1.bf16.msra.mxu0 0
        %767 = vmatprep.subr.bf16.mxu0 0
        %768 = vmatpush1.bf16.msra.mxu0 0
        %769 = vmatprep.subr.bf16.mxu0 0
        %770 = vmatpush1.bf16.msra.mxu0 0
        %771 = vmatprep.subr.bf16.mxu0 0
        %772 = vmatpush1.bf16.msra.mxu0 0
        %773 = vmatprep.subr.bf16.mxu0 0
        %774 = vmatpush1.bf16.msra.mxu0 0
        %775 = vmatprep.subr.bf16.mxu0 0
        %776 = vmatpush1.bf16.msra.mxu0 0
        %777 = vmatprep.subr.bf16.mxu0 0
        %778 = vmatpush1.bf16.msra.mxu0 0
        %779 = vmatprep.subr.bf16.mxu0 0
        %780 = vmatpush1.bf16.msra.mxu0 %v763
        %781 = vmatprep.subr.bf16.mxu0 0
        %782 = vmatpush2.bf16.msra.mxu0 0
        %783 = vmatprep.subr.bf16.mxu0 0
        %784 = vmatpush2.bf16.msra.mxu0 0
        %785 = vmatprep.subr.bf16.mxu0 0
        %786 = vmatpush2.bf16.msra.mxu0 0
        %787 = vmatprep.subr.bf16.mxu0 0
        %788 = vmatpush2.bf16.msra.mxu0 0
        %789 = vmatprep.subr.bf16.mxu0 0
        %790 = vmatpush2.bf16.msra.mxu0 0
        %791 = vmatprep.subr.bf16.mxu0 0
        %792 = vmatpush2.bf16.msra.mxu0 0
        %793 = vmatprep.subr.bf16.mxu0 0
        %794 = vmatpush2.bf16.msra.mxu0 0
        %795 = vmatprep.subr.bf16.mxu0 0
        %796 = vmatpush2.bf16.msra.mxu0 0
        %797 = vmatprep.mubr.bf16.mxu0 0
        %798 = vmatmul.mubr.bf16.gmra.mxu0 %v759
        %v799 = vpop.f32.mrf.mxu0
        %v800 = vadd.f32 0.0, %v799
        %v801 = vpop.f32.mrf.mxu0
        %v802 = vpop.f32.mrf.mxu0
        %v803 = vpop.f32.mrf.mxu0
        %804 = vdwg.mxu0
        %805 = vrot.lane.b32.xlu0 %v623, 64
        %v806 = vpop.permute.xlu0 %805
        %v808 = vsel %vm731, %v755, 0
        %v811 = vsel %vm761, %v806, 0
        %813 = vmatprep.subr.bf16.mxu0 0
        %814 = vmatpush1.bf16.msra.mxu0 0
        %815 = vmatprep.subr.bf16.mxu0 0
        %816 = vmatpush1.bf16.msra.mxu0 0
        %817 = vmatprep.subr.bf16.mxu0 0
        %818 = vmatpush1.bf16.msra.mxu0 0
        %819 = vmatprep.subr.bf16.mxu0 0
        %820 = vmatpush1.bf16.msra.mxu0 0
        %821 = vmatprep.subr.bf16.mxu0 0
        %822 = vmatpush1.bf16.msra.mxu0 0
        %823 = vmatprep.subr.bf16.mxu0 0
        %824 = vmatpush1.bf16.msra.mxu0 0
        %825 = vmatprep.subr.bf16.mxu0 0
        %826 = vmatpush1.bf16.msra.mxu0 0
        %827 = vmatprep.subr.bf16.mxu0 0
        %828 = vmatpush1.bf16.msra.mxu0 %v811
        %829 = vmatprep.subr.bf16.mxu0 0
        %830 = vmatpush2.bf16.msra.mxu0 0
        %831 = vmatprep.subr.bf16.mxu0 0
        %832 = vmatpush2.bf16.msra.mxu0 0
        %833 = vmatprep.subr.bf16.mxu0 0
        %834 = vmatpush2.bf16.msra.mxu0 0
        %835 = vmatprep.subr.bf16.mxu0 0
        %836 = vmatpush2.bf16.msra.mxu0 0
        %837 = vmatprep.subr.bf16.mxu0 0
        %838 = vmatpush2.bf16.msra.mxu0 0
        %839 = vmatprep.subr.bf16.mxu0 0
        %840 = vmatpush2.bf16.msra.mxu0 0
        %841 = vmatprep.subr.bf16.mxu0 0
        %842 = vmatpush2.bf16.msra.mxu0 0
        %843 = vmatprep.subr.bf16.mxu0 0
        %844 = vmatpush2.bf16.msra.mxu0 0
        %845 = vmatprep.mubr.bf16.mxu0 0
        %846 = vmatmul.mubr.bf16.gmra.mxu0 %v808
        %v847 = vpop.f32.mrf.mxu0
        %v848 = vadd.f32 0.0, %v847
        %v849 = vpop.f32.mrf.mxu0
        %v850 = vpop.f32.mrf.mxu0
        %v851 = vpop.f32.mrf.mxu0
        %852 = vdwg.mxu0
        %v853 = vld [vmem:[%s4] sm:$0xf]
        %v854 = vld [vmem:[%s4 + $0x4] sm:$0xf]
        %v855 = vld [vmem:[%s4 + $0x8] sm:$0xf]
        %v856 = vld [vmem:[%s4 + $0xc] sm:$0xf]
        %v857 = vpack.c.bf16 %v800, %v800
        %v858 = vpack.c.bf16 %v848, %v848
        %v861 = vunpack.c.l.b16 %v855
        %v862 = vunpack.c.l.b16 %v856
        %v863 = vpack.c.b16 %v862, %v861
        %v866 = vsel %vm626, %v858, 0
        %868 = vmatprep.subr.bf16.mxu0 0
        %869 = vmatpush1.bf16.msra.mxu0 0
        %870 = vmatprep.subr.bf16.mxu0 0
        %871 = vmatpush1.bf16.msra.mxu0 0
        %872 = vmatprep.subr.bf16.mxu0 0
        %873 = vmatpush1.bf16.msra.mxu0 0
        %874 = vmatprep.subr.bf16.mxu0 0
        %875 = vmatpush1.bf16.msra.mxu0 0
        %876 = vmatprep.subr.bf16.mxu0 0
        %877 = vmatpush1.bf16.msra.mxu0 0
        %878 = vmatprep.subr.bf16.mxu0 0
        %879 = vmatpush1.bf16.msra.mxu0 0
        %880 = vmatprep.subr.bf16.mxu0 0
        %881 = vmatpush1.bf16.msra.mxu0 0
        %882 = vmatprep.subr.bf16.mxu0 0
        %883 = vmatpush1.bf16.msra.mxu0 %v863
        %884 = vmatprep.subr.bf16.mxu0 0
        %885 = vmatpush2.bf16.msra.mxu0 0
        %886 = vmatprep.subr.bf16.mxu0 0
        %887 = vmatpush2.bf16.msra.mxu0 0
        %888 = vmatprep.subr.bf16.mxu0 0
        %889 = vmatpush2.bf16.msra.mxu0 0
        %890 = vmatprep.subr.bf16.mxu0 0
        %891 = vmatpush2.bf16.msra.mxu0 0
        %892 = vmatprep.subr.bf16.mxu0 0
        %893 = vmatpush2.bf16.msra.mxu0 0
        %894 = vmatprep.subr.bf16.mxu0 0
        %895 = vmatpush2.bf16.msra.mxu0 0
        %896 = vmatprep.subr.bf16.mxu0 0
        %897 = vmatpush2.bf16.msra.mxu0 0
        %898 = vmatprep.subr.bf16.mxu0 0
        %899 = vmatpush2.bf16.msra.mxu0 0
        %900 = vmatprep.mubr.bf16.mxu0 0
        %901 = vmatmul.mubr.bf16.gmra.mxu0 %v866
        %v902 = vpop.f32.mrf.mxu0
        %v903 = vadd.f32 0.0, %v902
        %v904 = vpop.f32.mrf.mxu0
        %v905 = vpop.f32.mrf.mxu0
        %v906 = vpop.f32.mrf.mxu0
        %907 = vdwg.mxu0
        %v910 = vunpack.c.l.b16 %v853
        %v911 = vunpack.c.l.b16 %v854
        %v912 = vpack.c.b16 %v911, %v910
        %v915 = vsel %vm626, %v857, 0
        %917 = vmatprep.subr.bf16.mxu0 0
        %918 = vmatpush1.bf16.msra.mxu0 0
        %919 = vmatprep.subr.bf16.mxu0 0
        %920 = vmatpush1.bf16.msra.mxu0 0
        %921 = vmatprep.subr.bf16.mxu0 0
        %922 = vmatpush1.bf16.msra.mxu0 0
        %923 = vmatprep.subr.bf16.mxu0 0
        %924 = vmatpush1.bf16.msra.mxu0 0
        %925 = vmatprep.subr.bf16.mxu0 0
        %926 = vmatpush1.bf16.msra.mxu0 0
        %927 = vmatprep.subr.bf16.mxu0 0
        %928 = vmatpush1.bf16.msra.mxu0 0
        %929 = vmatprep.subr.bf16.mxu0 0
        %930 = vmatpush1.bf16.msra.mxu0 0
        %931 = vmatprep.subr.bf16.mxu0 0
        %932 = vmatpush1.bf16.msra.mxu0 %v912
        %933 = vmatprep.subr.bf16.mxu0 0
        %934 = vmatpush2.bf16.msra.mxu0 0
        %935 = vmatprep.subr.bf16.mxu0 0
        %936 = vmatpush2.bf16.msra.mxu0 0
        %937 = vmatprep.subr.bf16.mxu0 0
        %938 = vmatpush2.bf16.msra.mxu0 0
        %939 = vmatprep.subr.bf16.mxu0 0
        %940 = vmatpush2.bf16.msra.mxu0 0
        %941 = vmatprep.subr.bf16.mxu0 0
        %942 = vmatpush2.bf16.msra.mxu0 0
        %943 = vmatprep.subr.bf16.mxu0 0
        %944 = vmatpush2.bf16.msra.mxu0 0
        %945 = vmatprep.subr.bf16.mxu0 0
        %946 = vmatpush2.bf16.msra.mxu0 0
        %947 = vmatprep.subr.bf16.mxu0 0
        %948 = vmatpush2.bf16.msra.mxu0 0
        %949 = vmatprep.mubr.bf16.mxu0 0
        %950 = vmatmul.mubr.bf16.gmra.mxu0 %v915
        %v951 = vpop.f32.mrf.mxu0
        %v952 = vadd.f32 %v903, %v951
        %v953 = vpop.f32.mrf.mxu0
        %v954 = vpop.f32.mrf.mxu0
        %v955 = vpop.f32.mrf.mxu0
        %956 = vdwg.mxu0
        %v957 = vld [vmem:[%s5] sm:$0x1]
        %v959 = vlaneseq
        %v960 = vshrl.u32 %v959, 7
        %v961 = vsub.s32 0, %v960
        %v962 = vrot.slane %v957, %v961
        %v964 = vadd.f32 %v952, %v962
        %v965 = vadd.f32 %v550, %v964
        %v966 = vld [vmem:[#allocation5] sm:$0x1]
        %v967 = vld [vmem:[#allocation7] sm:$0x1]
        %v968 = vsel %vm575, %v965, 0.0
        %969 = vadd.xlane.f32.xlu0 %v968
        %v970 = vpop.xlane.xlu0 %969
        %v971 = vrcp.pop 32.0
        %v972 = vmul.f32 %v970, %v971
        %v973 = vsub.f32 %v965, %v972
        %v974 = vmul.f32 %v973, %v973
        %v975 = vsel %vm575, %v974, 0.0
        %976 = vadd.xlane.f32.xlu0 %v975
        %v977 = vpop.xlane.xlu0 %976
        %v978 = vmul.f32 %v977, %v971
        %v979 = vadd.f32 %v978, 1e-05
        %v980 = vrsqrt.pop %v979
        %v981 = vmul.f32 %v973, %v980
        %v983 = vlaneseq
        %v984 = vshrl.u32 %v983, 7
        %v985 = vsub.s32 0, %v984
        %v986 = vrot.slane %v966, %v985
        %v988 = vmul.f32 %v981, %v986
        %v990 = vlaneseq
        %v991 = vshrl.u32 %v990, 7
        %v992 = vsub.s32 0, %v991
        %v993 = vrot.slane %v967, %v992
        %v995 = vadd.f32 %v988, %v993
        %v996 = vpack.c.bf16 %v995, %v995
        %v997 = vld [vmem:[#allocation8] sm:$0xf]
        %v998 = vld [vmem:[#allocation8 + $0x4] sm:$0xf]
        %v999 = vld [vmem:[#allocation8 + $0x8] sm:$0xf]
        %v1000 = vld [vmem:[#allocation8 + $0xc] sm:$0xf]
        %v1001 = vld [vmem:[#allocation10] sm:$0x1]
        %v1003 = vlaneseq
        %v1004 = vshrl.u32 %v1003, 7
        %v1005 = vsub.s32 0, %v1004
        %v1006 = vrot.slane %v1001, %v1005
        %v1012 = vunpack.c.l.b16 %v997
        %v1013 = vunpack.c.l.b16 %v998
        %v1014 = vunpack.c.l.b16 %v999
        %v1015 = vunpack.c.l.b16 %v1000
        %v1016 = vpack.c.b16 %v1013, %v1012
        %v1017 = vpack.c.b16 %v1015, %v1014
        %v1021 = vsel %vm575, %v996, 0
        %1023 = vmatprep.subr.bf16.mxu0 0
        %1024 = vmatpush1.bf16.msra.mxu0 0
        %1025 = vmatprep.subr.bf16.mxu0 0
        %1026 = vmatpush1.bf16.msra.mxu0 0
        %1027 = vmatprep.subr.bf16.mxu0 0
        %1028 = vmatpush1.bf16.msra.mxu0 0
        %1029 = vmatprep.subr.bf16.mxu0 0
        %1030 = vmatpush1.bf16.msra.mxu0 0
        %1031 = vmatprep.subr.bf16.mxu0 0
        %1032 = vmatpush1.bf16.msra.mxu0 0
        %1033 = vmatprep.subr.bf16.mxu0 0
        %1034 = vmatpush1.bf16.msra.mxu0 0
        %1035 = vmatprep.subr.bf16.mxu0 0
        %1036 = vmatpush1.bf16.msra.mxu0 %v1017
        %1037 = vmatprep.subr.bf16.mxu0 0
        %1038 = vmatpush1.bf16.msra.mxu0 %v1016
        %1039 = vmatprep.subr.bf16.mxu0 0
        %1040 = vmatpush2.bf16.msra.mxu0 0
        %1041 = vmatprep.subr.bf16.mxu0 0
        %1042 = vmatpush2.bf16.msra.mxu0 0
        %1043 = vmatprep.subr.bf16.mxu0 0
        %1044 = vmatpush2.bf16.msra.mxu0 0
        %1045 = vmatprep.subr.bf16.mxu0 0
        %1046 = vmatpush2.bf16.msra.mxu0 0
        %1047 = vmatprep.subr.bf16.mxu0 0
        %1048 = vmatpush2.bf16.msra.mxu0 0
        %1049 = vmatprep.subr.bf16.mxu0 0
        %1050 = vmatpush2.bf16.msra.mxu0 0
        %1051 = vmatprep.subr.bf16.mxu0 0
        %1052 = vmatpush2.bf16.msra.mxu0 0
        %1053 = vmatprep.subr.bf16.mxu0 0
        %1054 = vmatpush2.bf16.msra.mxu0 0
        %1055 = vmatprep.mubr.bf16.mxu0 0
        %1056 = vmatmul.mubr.bf16.gmra.mxu0 %v1021
        %v1057 = vpop.f32.mrf.mxu0
        %v1058 = vadd.f32 %v1006, %v1057
        %v1059 = vpop.f32.mrf.mxu0
        %v1060 = vpop.f32.mrf.mxu0
        %v1061 = vpop.f32.mrf.mxu0
        %1062 = vdwg.mxu0
        %v1063 = vmax.f32 %v1058, 0.0
        %v1064 = vpack.c.bf16 %v1063, %v1063
        %v1065 = vld [vmem:[%s10] sm:$0xf]
        %v1066 = vld [vmem:[%s10 + $0x4] sm:$0xf]
        %v1067 = vld [vmem:[%s10 + $0x8] sm:$0xf]
        %v1068 = vld [vmem:[%s10 + $0xc] sm:$0xf]
        %v1069 = vld [vmem:[%s10 + $0x10] sm:$0xf]
        %v1070 = vld [vmem:[%s10 + $0x14] sm:$0xf]
        %v1071 = vld [vmem:[%s10 + $0x18] sm:$0xf]
        %v1072 = vld [vmem:[%s10 + $0x1c] sm:$0xf]
        %v1073 = vld [vmem:[%s11] sm:$0x1]
        %v1075 = vlaneseq
        %v1076 = vshrl.u32 %v1075, 7
        %v1077 = vsub.s32 0, %v1076
        %v1078 = vrot.slane %v1073, %v1077
        %v1088 = vunpack.c.l.b16 %v1065
        %v1089 = vunpack.c.l.b16 %v1066
        %v1090 = vunpack.c.l.b16 %v1067
        %v1091 = vunpack.c.l.b16 %v1068
        %v1092 = vunpack.c.l.b16 %v1069
        %v1093 = vunpack.c.l.b16 %v1070
        %v1094 = vunpack.c.l.b16 %v1071
        %v1095 = vunpack.c.l.b16 %v1072
        %v1096 = vpack.c.b16 %v1089, %v1088
        %v1097 = vpack.c.b16 %v1091, %v1090
        %v1098 = vpack.c.b16 %v1093, %v1092
        %v1099 = vpack.c.b16 %v1095, %v1094
        %vm1104 = vcmask 523264
        %v1106 = vsel %vm1104, %v1064, 0
        %1108 = vmatprep.subr.bf16.mxu0 0
        %1109 = vmatpush1.bf16.msra.mxu0 0
        %1110 = vmatprep.subr.bf16.mxu0 0
        %1111 = vmatpush1.bf16.msra.mxu0 0
        %1112 = vmatprep.subr.bf16.mxu0 0
        %1113 = vmatpush1.bf16.msra.mxu0 0
        %1114 = vmatprep.subr.bf16.mxu0 0
        %1115 = vmatpush1.bf16.msra.mxu0 0
        %1116 = vmatprep.subr.bf16.mxu0 0
        %1117 = vmatpush1.bf16.msra.mxu0 %v1099
        %1118 = vmatprep.subr.bf16.mxu0 0
        %1119 = vmatpush1.bf16.msra.mxu0 %v1098
        %1120 = vmatprep.subr.bf16.mxu0 0
        %1121 = vmatpush1.bf16.msra.mxu0 %v1097
        %1122 = vmatprep.subr.bf16.mxu0 0
        %1123 = vmatpush1.bf16.msra.mxu0 %v1096
        %1124 = vmatprep.subr.bf16.mxu0 0
        %1125 = vmatpush2.bf16.msra.mxu0 0
        %1126 = vmatprep.subr.bf16.mxu0 0
        %1127 = vmatpush2.bf16.msra.mxu0 0
        %1128 = vmatprep.subr.bf16.mxu0 0
        %1129 = vmatpush2.bf16.msra.mxu0 0
        %1130 = vmatprep.subr.bf16.mxu0 0
        %1131 = vmatpush2.bf16.msra.mxu0 0
        %1132 = vmatprep.subr.bf16.mxu0 0
        %1133 = vmatpush2.bf16.msra.mxu0 0
        %1134 = vmatprep.subr.bf16.mxu0 0
        %1135 = vmatpush2.bf16.msra.mxu0 0
        %1136 = vmatprep.subr.bf16.mxu0 0
        %1137 = vmatpush2.bf16.msra.mxu0 0
        %1138 = vmatprep.subr.bf16.mxu0 0
        %1139 = vmatpush2.bf16.msra.mxu0 0
        %1140 = vmatprep.mubr.bf16.mxu0 0
        %1141 = vmatmul.mubr.bf16.gmra.mxu0 %v1106
        %v1142 = vpop.f32.mrf.mxu0
        %v1143 = vadd.f32 %v1078, %v1142
        %v1144 = vpop.f32.mrf.mxu0
        %v1145 = vpop.f32.mrf.mxu0
        %v1146 = vpop.f32.mrf.mxu0
        %1147 = vdwg.mxu0
        %v1148 = vadd.f32 %v995, %v1143
        %v1149 = vld [vmem:[%s12] sm:$0x1]
        %v1150 = vld [vmem:[%s13] sm:$0x1]
        %v1151 = vsel %vm575, %v1148, 0.0
        %1152 = vadd.xlane.f32.xlu0 %v1151
        %v1153 = vpop.xlane.xlu0 %1152
        %v1154 = vmul.f32 %v1153, %v971
        %v1155 = vsub.f32 %v1148, %v1154
        %v1156 = vmul.f32 %v1155, %v1155
        %v1157 = vsel %vm575, %v1156, 0.0
        %1158 = vadd.xlane.f32.xlu0 %v1157
        %v1159 = vpop.xlane.xlu0 %1158
        %v1160 = vmul.f32 %v1159, %v971
        %v1161 = vadd.f32 %v1160, 1e-05
        %v1162 = vrsqrt.pop %v1161
        %v1163 = vmul.f32 %v1155, %v1162
        %v1165 = vlaneseq
        %v1166 = vshrl.u32 %v1165, 7
        %v1167 = vsub.s32 0, %v1166
        %v1168 = vrot.slane %v1149, %v1167
        %v1170 = vmul.f32 %v1163, %v1168
        %v1172 = vlaneseq
        %v1173 = vshrl.u32 %v1172, 7
        %v1174 = vsub.s32 0, %v1173
        %v1175 = vrot.slane %v1150, %v1174
        %v1177 = vadd.f32 %v1170, %v1175
        %1178 = vst.msk [vmem:[%s544] sm:$0xff] %vm575, %v1177
        %s1179 = sand.u32 %s345, 1
        %s1180 = scalar_lea.sflag [#allocation4], %s1179
        %s1181 = sand.u32 %s345, 1
        %s1182 = smul.addr %s1181, 8
        %s1183 = scalar_lea.vmem [#allocation11], %s1182
        // Predicated region
        $region97: #{tpu_custom_call.1} parent=75 // pred_check
          %p1184 = pneg %p355
        $region98: #{tpu_custom_call.1} parent=75 // pred_check_branch
          %1186 = sbr.rel (%p1184) target = $region100
        $region99: #{tpu_custom_call.1} parent=75 // pred_region
          %s1188 = ssub.s32 128, 128
          %1189 = vsyncadd %s1180, %s1188
          %s1190 = smul.addr %s33, 128
          %s1191 = scalar_lea.hbm %s14, %s1190
          %s1193 = sshll.u32 %s1183, 4
          %s1194 = int_to_ptr.vmem [resolvable:$true] %s1193
          %1196 = dma.vmem_to_hbm [thread:$0]  %s1194, 128, %s1191, %s1180
        $region100: #{tpu_custom_call.1} parent=75 // pred_fallthru
          _
      $region76: #{tpu_custom_call.1} parent=5 // pred_fallthru
        _
      %p1197 = scmp.le.s32.totalorder 2, %s28
      // Predicated region
      $region101: #{tpu_custom_call.1} parent=5 // pred_check
        %p1198 = pneg %p1197
      $region102: #{tpu_custom_call.1} parent=5 // pred_check_branch
        %1200 = sbr.rel (%p1198) target = $region104
      $region103: #{tpu_custom_call.1} parent=5 // pred_region
        %s1201 = ssub.s32 %s28, 2
        // Predicated region
        $region105: #{tpu_custom_call.1} parent=103 // pred_check
          %p1202 = pneg %p361
        $region106: #{tpu_custom_call.1} parent=103 // pred_check_branch
          %1204 = sbr.rel (%p1202) target = $region108
        $region107: #{tpu_custom_call.1} parent=103 // pred_region
          %s1205 = sand.u32 %s346, 1
          %s1206 = scalar_lea.sflag [#allocation4], %s1205
          %s1207 = sand.u32 %s346, 1
          %s1208 = smul.addr %s1207, 8
          %s1209 = scalar_lea.vmem [#allocation11], %s1208
          %1210 = dma.done %s1206, 128
        $region108: #{tpu_custom_call.1} parent=103 // pred_fallthru
          _
      $region104: #{tpu_custom_call.1} parent=5 // pred_fallthru
        _
    $region6: #{tpu_custom_call.1} parent=1 // loop_footer
      %s32 = sadd.s32 1, %s28
    $region7: #{tpu_custom_call.1} parent=1 // loop_footer_branch
      %27 = sbr.rel target = $region3
    $region8: #{tpu_custom_call.1} parent=1 // loop_exit
      _
    %1211 = vsyncpa [#allocation3], 1
    %s1212 = scalar_lea.sflag [#allocation3], 1
    %1213 = vsyncpa %s1212, 1
    %1214 = vsyncpa [#allocation6], 1
    %1215 = vsyncpa [#allocation9], 1
    %1216 = vsyncpa [#allocation4], 1
    %s1217 = scalar_lea.sflag [#allocation4], 1
    %1218 = vsyncpa %s1217, 1

</llo_original>
